<compile_context>
chip_gen: v6e
topology: v6e:2x2x1
jax: 0.10.0
libtpu: 0.0.40
codegen_flags: <defaults>
</compile_context>

<pallas_src>
import functools

import jax
import jax.numpy as jnp
from jax import lax
from jax.experimental import pallas as pl
from jax.experimental.pallas import tpu as pltpu


def _round_up(v, m):
    return ((v + m - 1) // m) * m


def _cdiv(a, b):
    return -(-a // b)


@functools.lru_cache(maxsize=None)
def _vmem_limit_bytes():
    # Generation-aware scoped-VMEM limit: ~3/4 of physical, capped at 96 MiB
    # (v5e/v6e: 96 MiB, v7x: 48 MiB).  Conservative fallback if the query is
    # unavailable.
    try:
        cap = int(pltpu.get_tpu_info().vmem_capacity_bytes)
    except Exception:
        cap = 0
    if cap <= 0:
        return 48 * 1024 * 1024
    return int(min(cap * 3 // 4, 96 * 1024 * 1024))


def _pick_tile(t_out, time_tile, mult):
    t_tile = _round_up(min(int(time_tile), _round_up(t_out, mult)), mult)
    n_tiles = _cdiv(t_out, t_tile)
    return t_tile, n_tiles


def _swish(v, *, approx=False):
    # exp lowers to the EUP; with approx=True the reciprocal is also an EUP op.
    e = jnp.exp(-v)
    if approx:
        return v * pl.reciprocal(1.0 + e, approx=True)
    return v * (1.0 / (1.0 + e))


# ---------------------------------------------------------------------------
# ConvModule kernel: [fused previous-layer BN (+Swish) on the input tile]
#   -> depthwise-folded pointwise conv on the MXU (+ bias)
#   -> raw (pre-BN) output tile + per-(batch, tile) BN partial sums.
# ---------------------------------------------------------------------------
def _conv_kernel(x_ref, insc_ref, insh_ref, w_ref, b_ref, y_ref, stats_ref, *,
                 t_tile, kernel_size, stride, dilation, rem,
                 apply_in_bn, apply_in_act, matmul_dtype, approx):
    c_out = y_ref.shape[-1]
    t = pl.program_id(1)

    def transform(v):
        v = v.astype(jnp.float32)
        if apply_in_bn:
            v = v * insc_ref[...] + insh_ref[...]
        if apply_in_act:
            v = _swish(v, approx=approx)
        return v

    base = pl.multiple_of(t * (t_tile * stride), 8)
    acc = jnp.zeros((t_tile, c_out), jnp.float32)
    if stride == 1:
        # Load + transform the halo window once; taps are static slices.
        win = _round_up(t_tile + (kernel_size - 1) * dilation, 8)
        xw = transform(x_ref[pl.ds(base, win), :]).astype(matmul_dtype)
        for k in range(kernel_size):
            xk = xw[k * dilation:k * dilation + t_tile, :]
            acc = acc + jnp.dot(xk, w_ref[k], preferred_element_type=jnp.float32)
    else:
        # Strided taps (only last conv layer / residual): per-tap strided loads.
        for k in range(kernel_size):
            sl = x_ref[pl.ds(base + k * dilation, t_tile, stride=stride), :]
            xk = transform(sl).astype(matmul_dtype)
            acc = acc + jnp.dot(xk, w_ref[k], preferred_element_type=jnp.float32)
    y = acc + b_ref[...]
    y_ref[...] = y.astype(y_ref.dtype)

    def _sums(v):
        return jnp.concatenate([jnp.sum(v, axis=0, keepdims=True),
                                jnp.sum(v * v, axis=0, keepdims=True)], axis=0)

    if rem is None:
        stats_ref[...] = _sums(y)
    else:
        last = pl.num_programs(1) - 1

        @pl.when(t != last)
        def _():
            stats_ref[...] = _sums(y)

        @pl.when(t == last)
        def _():
            stats_ref[...] = _sums(y[:rem, :])


def conv_module_raw(x_raw, in_scale, in_shift, in_act, t_valid, params, *,
                    kernel_size, stride=1, dilation=1, padding=0, eps=1e-5,
                    time_tile=512, prefer_bf16_matmul=False, approx_swish=False):
    """One ConvModule.  Returns (y_raw, bn_scale, bn_shift, t_out).

    y_raw is the pre-BatchNorm conv output; this module's own BN (+Swish) is
    applied lazily by whichever kernel consumes y_raw (next ConvModule, SE
    pool, or the final gate kernel), eliminating a full HBM round trip.
    """
    w_dw, b_dw, w_pw, b_pw, gamma, beta = params
    B = x_raw.shape[0]
    c_in = x_raw.shape[-1]
    c_out = w_pw.shape[1]
    t_out = (t_valid + 2 * padding - dilation * (kernel_size - 1) - 1) // stride + 1
    assert t_out > 0

    matmul_dtype = jnp.bfloat16 if prefer_bf16_matmul else jnp.float32
    act_dtype = jnp.bfloat16 if prefer_bf16_matmul else jnp.float32
    sub_mult = 16 if prefer_bf16_matmul else 8
    t_tile, n_tiles = _pick_tile(t_out, time_tile, sub_mult)
    t_out_pad = n_tiles * t_tile
    rem = t_out - (n_tiles - 1) * t_tile
    rem = None if rem == t_tile else rem

    # Depthwise folded into the pointwise matmul; weights cast once here.
    w_fold = (w_dw[:, :, None].astype(jnp.float32) *
              w_pw[None, :, :].astype(jnp.float32)).astype(matmul_dtype)
    b_eff = (b_dw.reshape(1, c_in).astype(jnp.float32) @ w_pw.astype(jnp.float32)
             + b_pw.reshape(1, c_out).astype(jnp.float32))

    apply_in_bn = in_scale is not None
    if apply_in_bn:
        insc = in_scale.reshape(1, c_in).astype(jnp.float32)
        insh = in_shift.reshape(1, c_in).astype(jnp.float32)
        safe = jnp.where(insc == 0.0, 1.0, insc)
        # Raw pad value that maps to 0 after the fused affine (Swish(0) == 0),
        # so 'zeros' padding of the conceptual (post-BN) input is preserved.
        pad_row = (-insh / safe).reshape(1, 1, c_in)
    else:
        insc = jnp.ones((1, c_in), jnp.float32)
        insh = jnp.zeros((1, c_in), jnp.float32)
        pad_row = jnp.zeros((1, 1, c_in), jnp.float32)

    if stride == 1:
        win = _round_up(t_tile + (kernel_size - 1) * dilation, 8)
        t_need = (n_tiles - 1) * t_tile + win
    else:
        t_need = (t_out_pad - 1) * stride + (kernel_size - 1) * dilation + 1

    # TODO(synk): replace this pad/concat + full-T-resident x block with
    # halo-tiled Element blocks so x VMEM is O(t_tile) and the extra HBM round
    # trip of x disappears for long sequences (v7x 64 MiB VMEM).
    x_valid = x_raw[:, :t_valid, :]
    store_dtype = x_valid.dtype
    pad_right = max(t_need - padding - t_valid, 0)
    parts = []
    if padding > 0:
        parts.append(jnp.broadcast_to(pad_row.astype(store_dtype),
                                      (B, padding, c_in)))
    parts.append(x_valid)
    if pad_right > 0:
        parts.append(jnp.broadcast_to(pad_row.astype(store_dtype),
                                      (B, pad_right, c_in)))
    x_in = jnp.concatenate(parts, axis=1) if len(parts) > 1 else x_valid
    t_store = x_in.shape[1]

    kernel = functools.partial(
        _conv_kernel, t_tile=t_tile, kernel_size=kernel_size, stride=stride,
        dilation=dilation, rem=rem, apply_in_bn=apply_in_bn,
        apply_in_act=bool(in_act), matmul_dtype=matmul_dtype,
        approx=approx_swish)

    y_raw, stats = pl.pallas_call(
        kernel,
        grid=(B, n_tiles),
        in_specs=[
            pl.BlockSpec((None, t_store, c_in), lambda b, t: (b, 0, 0)),
            pl.BlockSpec((1, c_in), lambda b, t: (0, 0)),
            pl.BlockSpec((1, c_in), lambda b, t: (0, 0)),
            pl.BlockSpec((kernel_size, c_in, c_out), lambda b, t: (0, 0, 0)),
            pl.BlockSpec((1, c_out), lambda b, t: (0, 0)),
        ],
        out_specs=(
            pl.BlockSpec((None, t_tile, c_out), lambda b, t: (b, t, 0)),
            pl.BlockSpec((None, None, 2, c_out), lambda b, t: (b, t, 0, 0)),
        ),
        out_shape=(
            jax.ShapeDtypeStruct((B, t_out_pad, c_out), act_dtype),
            jax.ShapeDtypeStruct((B, n_tiles, 2, c_out), jnp.float32),
        ),
        compiler_params=pltpu.CompilerParams(
            dimension_semantics=("parallel", "parallel"),
            vmem_limit_bytes=_vmem_limit_bytes()),
    )(x_in, insc, insh, w_fold, b_eff)

    # BatchNorm statistics finish ((C,)-sized, left to XLA).
    count = jnp.float32(B * t_out)
    sum_c = jnp.sum(stats[:, :, 0, :], axis=(0, 1))
    sq_c = jnp.sum(stats[:, :, 1, :], axis=(0, 1))
    mean = sum_c / count
    var = jnp.maximum(sq_c / count - mean * mean, 0.0)
    inv = lax.rsqrt(var + eps)
    g = gamma.reshape(c_out)
    scale = (g * inv).reshape(1, c_out).astype(jnp.float32)
    shift = (beta.reshape(c_out) - mean * g * inv).reshape(1, c_out).astype(jnp.float32)
    return y_raw, scale, shift, t_out


# ---------------------------------------------------------------------------
# SE squeeze: fused BN + Swish + per-(batch, tile) channel sums (tiny output).
# ---------------------------------------------------------------------------
def _se_pool_kernel(c_ref, sc_ref, sh_ref, psum_ref, *, rem, approx):
    t = pl.program_id(1)
    c = _swish(c_ref[...].astype(jnp.float32) * sc_ref[...] + sh_ref[...],
               approx=approx)
    if rem is None:
        psum_ref[...] = jnp.sum(c, axis=0, keepdims=True)
    else:
        last = pl.num_programs(1) - 1

        @pl.when(t != last)
        def _():
            psum_ref[...] = jnp.sum(c, axis=0, keepdims=True)

        @pl.when(t == last)
        def _():
            psum_ref[...] = jnp.sum(c[:rem, :], axis=0, keepdims=True)


def se_pool(c_raw, scale, shift, t_out, *, time_tile, sub_mult, approx):
    B, t_pad, C = c_raw.shape
    t_tile, n_tiles = _pick_tile(t_out, time_tile, sub_mult)
    assert n_tiles * t_tile == t_pad
    rem = t_out - (n_tiles - 1) * t_tile
    rem = None if rem == t_tile else rem
    kern = functools.partial(_se_pool_kernel, rem=rem, approx=approx)
    psum = pl.pallas_call(
        kern,
        grid=(B, n_tiles),
        in_specs=[pl.BlockSpec((None, t_tile, C), lambda b, t: (b, t, 0)),
                  pl.BlockSpec((1, C), lambda b, t: (0, 0)),
                  pl.BlockSpec((1, C), lambda b, t: (0, 0))],
        out_specs=pl.BlockSpec((None, None, 1, C), lambda b, t: (b, t, 0, 0)),
        out_shape=jax.ShapeDtypeStruct((B, n_tiles, 1, C), jnp.float32),
        compiler_params=pltpu.CompilerParams(
            dimension_semantics=("parallel", "parallel"),
            vmem_limit_bytes=_vmem_limit_bytes()),
    )(c_raw, scale, shift)
    return jnp.sum(psum[:, :, 0, :], axis=1) / jnp.float32(t_out)


# ---------------------------------------------------------------------------
# Gate: SE-conv BN + Swish, * sigmoid context, (+ residual-conv BN), Swish.
# ---------------------------------------------------------------------------
def _gate_res_kernel(c_ref, csc_ref, csh_ref, ctx_ref, r_ref, rsc_ref, rsh_ref,
                     o_ref, *, approx):
    c = _swish(c_ref[...].astype(jnp.float32) * csc_ref[...] + csh_ref[...],
               approx=approx)
    r = r_ref[...].astype(jnp.float32) * rsc_ref[...] + rsh_ref[...]
    v = c * ctx_ref[...] + r
    o_ref[...] = _swish(v, approx=approx)


def _gate_kernel(c_ref, csc_ref, csh_ref, ctx_ref, o_ref, *, approx):
    c = _swish(c_ref[...].astype(jnp.float32) * csc_ref[...] + csh_ref[...],
               approx=approx)
    v = c * ctx_ref[...]
    o_ref[...] = _swish(v, approx=approx)


def se_gate(c_raw, c_scale, c_shift, ctx, r_raw, r_scale, r_shift, t_out, *,
            time_tile, sub_mult, approx):
    B, t_pad, C = c_raw.shape
    t_tile, n_tiles = _pick_tile(t_out, time_tile, sub_mult)
    assert n_tiles * t_tile == t_pad
    ctx3 = ctx.reshape(B, 1, C).astype(jnp.float32)
    tile_spec = pl.BlockSpec((None, t_tile, C), lambda b, t: (b, t, 0))
    vec_spec = pl.BlockSpec((1, C), lambda b, t: (0, 0))
    ctx_spec = pl.BlockSpec((None, 1, C), lambda b, t: (b, 0, 0))
    if r_raw is not None:
        assert r_raw.shape[1] == t_pad
        kern = functools.partial(_gate_res_kernel, approx=approx)
        in_specs = [tile_spec, vec_spec, vec_spec, ctx_spec,
                    tile_spec, vec_spec, vec_spec]
        args = (c_raw, c_scale, c_shift, ctx3, r_raw, r_scale, r_shift)
    else:
        kern = functools.partial(_gate_kernel, approx=approx)
        in_specs = [tile_spec, vec_spec, vec_spec, ctx_spec]
        args = (c_raw, c_scale, c_shift, ctx3)
    out_pad = pl.pallas_call(
        kern,
        grid=(B, n_tiles),
        in_specs=in_specs,
        out_specs=tile_spec,
        out_shape=jax.ShapeDtypeStruct((B, t_pad, C), jnp.float32),
        compiler_params=pltpu.CompilerParams(
            dimension_semantics=("parallel", "parallel"),
            vmem_limit_bytes=_vmem_limit_bytes()),
    )(*args)
    return out_pad[:, :t_out, :]


# ---------------------------------------------------------------------------
# ContextNetBlock forward built from the kernels above.
# ---------------------------------------------------------------------------
def contextnet_block_forward(x, params, *, kernel_size=3, stride=1, eps=1e-5,
                             time_tile=512, prefer_bf16_matmul=False,
                             approx_swish=False):
    """ContextNetBlock forward: convs -> SE -> (+ residual) -> Swish."""
    B, T, _ = x.shape
    sub_mult = 16 if prefer_bf16_matmul else 8
    common = dict(kernel_size=kernel_size, eps=eps, time_tile=time_tile,
                  prefer_bf16_matmul=prefer_bf16_matmul,
                  approx_swish=approx_swish)
    x32 = x.astype(jnp.float32)
    n_layers = len(params["convs"])

    cur, cur_sc, cur_sh, cur_act, t_cur = x32, None, None, False, T
    for i, p in enumerate(params["convs"]):
        s = stride if i == n_layers - 1 else 1
        pad = (kernel_size // 2 - stride + 1) if i == n_layers - 1 else kernel_size // 2
        cur, cur_sc, cur_sh, t_cur = conv_module_raw(
            cur, cur_sc, cur_sh, cur_act, t_cur, p, stride=s, padding=pad,
            **common)
        cur_act = True  # this layer's BN+Swish is fused into the next consumer

    se_conv_params, (w1, b1, w2, b2) = params["se"]
    c_raw, c_sc, c_sh, t_c = conv_module_raw(
        cur, cur_sc, cur_sh, True, t_cur, se_conv_params,
        stride=1, padding=kernel_size // 2, **common)

    # SE squeeze (fused BN+Swish+avg-pool, tiny output) + bottleneck MLP (XLA).
    avg = se_pool(c_raw, c_sc, c_sh, t_c, time_tile=time_tile,
                  sub_mult=sub_mult, approx=approx_swish)
    h = avg @ w1 + b1
    h = h * jax.nn.sigmoid(h)
    h = h @ w2 + b2
    h = h * jax.nn.sigmoid(h)
    ctx = jax.nn.sigmoid(h)

    if params["residual"] is not None:
        r_raw, r_sc, r_sh, t_r = conv_module_raw(
            x32, None, None, False, T, params["residual"],
            stride=stride, padding=kernel_size // 2 - stride + 1, **common)
        assert t_r == t_c
    else:
        r_raw, r_sc, r_sh = None, None, None

    out = se_gate(c_raw, c_sc, c_sh, ctx, r_raw, r_sc, r_sh, t_c,
                  time_tile=time_tile, sub_mult=sub_mult, approx=approx_swish)
    # TODO(synk): nn.Dropout(p) is stochastic train-time regularization; treated
    # as identity (inference-style forward).
    return out


# ---------------------------------------------------------------------------
# Parameter construction (shapes follow nn.Conv1d / BatchNorm1d / nn.Linear).
# ---------------------------------------------------------------------------
def make_conv_module_params(key, c_in, c_out, kernel_size):
    k1, k2, k3, k4, k5, k6 = jax.random.split(key, 6)
    w_dw = 0.3 * jax.random.normal(k1, (kernel_size, c_in), jnp.float32)
    b_dw = 0.1 * jax.random.normal(k2, (1, c_in), jnp.float32)
    w_pw = 0.3 * jax.random.normal(k3, (c_in, c_out), jnp.float32)
    b_pw = 0.1 * jax.random.normal(k4, (1, c_out), jnp.float32)
    gamma = 1.0 + 0.1 * jax.random.normal(k5, (1, c_out), jnp.float32)
    beta = 0.1 * jax.random.normal(k6, (1, c_out), jnp.float32)
    return (w_dw, b_dw, w_pw, b_pw, gamma, beta)


def make_block_params(key, c_in, c_out, kernel_size, num_layers, residual=True):
    keys = jax.random.split(key, num_layers + 3)
    convs = [make_conv_module_params(keys[i], c_in if i == 0 else c_out, c_out,
                                     kernel_size) for i in range(num_layers)]
    se_conv = make_conv_module_params(keys[num_layers], c_out, c_out, kernel_size)
    kb1, kb2 = jax.random.split(keys[num_layers + 1], 2)
    hidden = max(c_out // 8, 1)
    w1 = 0.3 * jax.random.normal(kb1, (c_out, hidden), jnp.float32)
    b1 = 0.1 * jnp.ones((hidden,), jnp.float32)
    w2 = 0.3 * jax.random.normal(kb2, (hidden, c_out), jnp.float32)
    b2 = 0.1 * jnp.ones((c_out,), jnp.float32)
    res = (make_conv_module_params(keys[num_layers + 2], c_in, c_out, kernel_size)
           if residual else None)
    return {"convs": convs, "se": (se_conv, (w1, b1, w2, b2)), "residual": res}


# ---------------------------------------------------------------------------
# Pure-JAX reference mirroring the PyTorch module (training-mode BatchNorm).
# ---------------------------------------------------------------------------
def _conv_module_ref(x, params, *, kernel_size, stride, padding, dilation=1,
                     eps=1e-5, activation=True):
    w_dw, b_dw, w_pw, b_pw, gamma, beta = params
    c_in = x.shape[-1]
    x_ncw = jnp.transpose(x, (0, 2, 1)).astype(jnp.float32)
    w_dw_t = jnp.transpose(w_dw, (1, 0))[:, None, :]                  # (C_in,1,K)
    dw = lax.conv_general_dilated(
        x_ncw, w_dw_t, window_strides=(stride,), padding=[(padding, padding)],
        rhs_dilation=(dilation,), dimension_numbers=("NCH", "OIH", "NCH"),
        feature_group_count=c_in)
    dw = dw + b_dw.reshape(1, c_in, 1)
    y = jnp.einsum("bct,cd->bdt", dw, w_pw) + b_pw.reshape(1, -1, 1)
    mean = jnp.mean(y, axis=(0, 2), keepdims=True)
    var = jnp.mean(jnp.square(y - mean), axis=(0, 2), keepdims=True)
    y = (y - mean) * lax.rsqrt(var + eps)
    y = y * gamma.reshape(1, -1, 1) + beta.reshape(1, -1, 1)
    if activation:
        y = y * jax.nn.sigmoid(y)
    return jnp.transpose(y, (0, 2, 1))


def _contextnet_block_ref(x, params, *, kernel_size, stride, eps=1e-5):
    n_layers = len(params["convs"])
    out = x
    for i, p in enumerate(params["convs"]):
        s = stride if i == n_layers - 1 else 1
        pad = (kernel_size // 2 - stride + 1) if i == n_layers - 1 else kernel_size // 2
        out = _conv_module_ref(out, p, kernel_size=kernel_size, stride=s,
                               padding=pad, eps=eps)
    se_conv, (w1, b1, w2, b2) = params["se"]
    c = _conv_module_ref(out, se_conv, kernel_size=kernel_size, stride=1,
                         padding=kernel_size // 2, eps=eps)
    avg = jnp.mean(c, axis=1)
    h = avg @ w1 + b1
    h = h * jax.nn.sigmoid(h)
    h = h @ w2 + b2
    h = h * jax.nn.sigmoid(h)
    ctx = jax.nn.sigmoid(h)[:, None, :]
    out = c * ctx
    if params["residual"] is not None:
        res = _conv_module_ref(x, params["residual"], kernel_size=kernel_size,
                               stride=stride,
                               padding=kernel_size // 2 - stride + 1,
                               eps=eps, activation=False)
        out = out + res
    return out * jax.nn.sigmoid(out)


if __name__ == "__main__":
    B, T = 2, 16
    C_IN, C_OUT = 8, 16
    K, NUM_LAYERS = 3, 2

    key = jax.random.PRNGKey(0)
    kx, kp = jax.random.split(key)
    x = jax.random.normal(kx, (B, T, C_IN), dtype=jnp.float32)
    params = make_block_params(kp, C_IN, C_OUT, K, NUM_LAYERS, residual=True)

    # Config 1: stride=1, exact f32 math, 2 time tiles per ConvModule
    # (exercises per-tile BN partial sums). Strict check.
    fwd1 = jax.jit(functools.partial(contextnet_block_forward,
                                     kernel_size=K, stride=1, time_tile=8))
    out1 = jax.block_until_ready(fwd1(x, params))
    ref1 = _contextnet_block_ref(x, params, kernel_size=K, stride=1)
    assert out1.shape == ref1.shape == (B, T, C_OUT), (out1.shape, ref1.shape)
    err1 = float(jnp.max(jnp.abs(out1 - ref1)))
    assert jnp.allclose(out1, ref1, rtol=2e-3, atol=2e-3), f"f32 max err {err1}"

    # Config 2: stride=2 (strided taps + non-multiple-of-tile time masking),
    # bf16 MXU operands, bf16 HBM intermediates, approx-reciprocal Swish.
    # Loose functional check.
    fwd2 = jax.jit(functools.partial(contextnet_block_forward,
                                     kernel_size=K, stride=2, time_tile=8,
                                     prefer_bf16_matmul=True,
                                     approx_swish=True))
    out2 = jax.block_until_ready(fwd2(x, params))
    ref2 = _contextnet_block_ref(x, params, kernel_size=K, stride=2)
    assert out2.shape == ref2.shape, (out2.shape, ref2.shape)
    err2 = float(jnp.max(jnp.abs(out2 - ref2)))
    assert jnp.isfinite(err2) and err2 < 0.5, f"bf16 max err {err2}"

    print("KERNEL_OK")
</pallas_src>

<mosaic_0001>
module attributes {stable_mosaic.version = 11 : i64} {
  func.func @_conv_kernel(%arg0: i32, %arg1: i32, %arg2: memref<1x24x8xf32, #tpu.memory_space<vmem>>, %arg3: memref<1x8xf32, #tpu.memory_space<vmem>>, %arg4: memref<1x8xf32, #tpu.memory_space<vmem>>, %arg5: memref<3x8x16xf32, #tpu.memory_space<vmem>>, %arg6: memref<1x16xf32, #tpu.memory_space<vmem>>, %arg7: memref<1x8x16xf32, #tpu.memory_space<vmem>>, %arg8: memref<1x1x2x16xf32, #tpu.memory_space<vmem>>) attributes {dimension_semantics = [#tpu.dimension_semantics<parallel>, #tpu.dimension_semantics<parallel>], iteration_bounds = array<i64: 2, 2>, scalar_prefetch = 0 : i64, scratch_operands = 0 : i64, tpu.core_type = #tpu.core_type<tc>, window_params = [{transform_indices = @transform_0, window_bounds = array<i64: 1, 24, 8>}, {pipeline_mode = #tpu.pipeline_mode<synchronous>, transform_indices = @transform_1, window_bounds = array<i64: 1, 8>}, {pipeline_mode = #tpu.pipeline_mode<synchronous>, transform_indices = @transform_2, window_bounds = array<i64: 1, 8>}, {pipeline_mode = #tpu.pipeline_mode<synchronous>, transform_indices = @transform_3, window_bounds = array<i64: 3, 8, 16>}, {pipeline_mode = #tpu.pipeline_mode<synchronous>, transform_indices = @transform_4, window_bounds = array<i64: 1, 16>}, {transform_indices = @transform_5, window_bounds = array<i64: 1, 8, 16>}, {transform_indices = @transform_6, window_bounds = array<i64: 1, 1, 2, 16>}]} {
    %c8_i32 = arith.constant 8 : i32
    %0 = arith.muli %arg1, %c8_i32 : i32
    %1 = tpu.assume_multiple %0, 8 : i32
    %cst = arith.constant 0.000000e+00 : f32
    %2 = vector.broadcast %cst : f32 to vector<8x16xf32>
    %c0 = arith.constant 0 : index
    %3 = arith.index_cast %1 : i32 to index
    %c0_0 = arith.constant 0 : index
    %4 = vector.load %arg2[%c0, %3, %c0_0] : memref<1x24x8xf32, #tpu.memory_space<vmem>>, vector<1x16x8xf32>
    %5 = vector.shape_cast %4 : vector<1x16x8xf32> to vector<16x8xf32>
    %6 = vector.extract_strided_slice %5 {offsets = [0, 0], sizes = [8, 8], strides = [1, 1]} : vector<16x8xf32> to vector<8x8xf32>
    %c0_1 = arith.constant 0 : index
    %c0_2 = arith.constant 0 : index
    %c0_3 = arith.constant 0 : index
    %7 = vector.load %arg5[%c0_1, %c0_2, %c0_3] : memref<3x8x16xf32, #tpu.memory_space<vmem>>, vector<1x8x16xf32>
    %8 = vector.shape_cast %7 : vector<1x8x16xf32> to vector<8x16xf32>
    %cst_4 = arith.constant dense<0.000000e+00> : vector<8x16xf32>
    %9 = tpu.matmul %6, %8, %cst_4 {dimension_numbers = #tpu.dot_dimension_numbers<[1], [0], [0], [1], [0, 0, 1, 1], [], []>} : vector<8x8xf32>, vector<8x16xf32>, vector<8x16xf32> -> vector<8x16xf32>
    %10 = arith.addf %2, %9 : vector<8x16xf32>
    %11 = vector.extract_strided_slice %5 {offsets = [1, 0], sizes = [8, 8], strides = [1, 1]} : vector<16x8xf32> to vector<8x8xf32>
    %c1 = arith.constant 1 : index
    %c0_5 = arith.constant 0 : index
    %c0_6 = arith.constant 0 : index
    %12 = vector.load %arg5[%c1, %c0_5, %c0_6] : memref<3x8x16xf32, #tpu.memory_space<vmem>>, vector<1x8x16xf32>
    %13 = vector.shape_cast %12 : vector<1x8x16xf32> to vector<8x16xf32>
    %cst_7 = arith.constant dense<0.000000e+00> : vector<8x16xf32>
    %14 = tpu.matmul %11, %13, %cst_7 {dimension_numbers = #tpu.dot_dimension_numbers<[1], [0], [0], [1], [0, 0, 1, 1], [], []>} : vector<8x8xf32>, vector<8x16xf32>, vector<8x16xf32> -> vector<8x16xf32>
    %15 = arith.addf %10, %14 : vector<8x16xf32>
    %16 = vector.extract_strided_slice %5 {offsets = [2, 0], sizes = [8, 8], strides = [1, 1]} : vector<16x8xf32> to vector<8x8xf32>
    %c2 = arith.constant 2 : index
    %c0_8 = arith.constant 0 : index
    %c0_9 = arith.constant 0 : index
    %17 = vector.load %arg5[%c2, %c0_8, %c0_9] : memref<3x8x16xf32, #tpu.memory_space<vmem>>, vector<1x8x16xf32>
    %18 = vector.shape_cast %17 : vector<1x8x16xf32> to vector<8x16xf32>
    %cst_10 = arith.constant dense<0.000000e+00> : vector<8x16xf32>
    %19 = tpu.matmul %16, %18, %cst_10 {dimension_numbers = #tpu.dot_dimension_numbers<[1], [0], [0], [1], [0, 0, 1, 1], [], []>} : vector<8x8xf32>, vector<8x16xf32>, vector<8x16xf32> -> vector<8x16xf32>
    %20 = arith.addf %15, %19 : vector<8x16xf32>
    %c0_11 = arith.constant 0 : index
    %c0_12 = arith.constant 0 : index
    %21 = vector.load %arg6[%c0_11, %c0_12] : memref<1x16xf32, #tpu.memory_space<vmem>>, vector<1x16xf32>
    %22 = vector.broadcast %21 : vector<1x16xf32> to vector<8x16xf32>
    %23 = arith.addf %20, %22 : vector<8x16xf32>
    %c0_13 = arith.constant 0 : index
    %c0_14 = arith.constant 0 : index
    %c0_15 = arith.constant 0 : index
    %24 = vector.load %arg7[%c0_13, %c0_14, %c0_15] : memref<1x8x16xf32, #tpu.memory_space<vmem>>, vector<1x8x16xf32>
    %25 = vector.shape_cast %24 : vector<1x8x16xf32> to vector<8x16xf32>
    %26 = vector.shape_cast %23 : vector<8x16xf32> to vector<1x8x16xf32>
    tpu.vector_store %arg7[%c0_13, %c0_14, %c0_15], %26 {strides = array<i32>} : memref<1x8x16xf32, #tpu.memory_space<vmem>>, vector<1x8x16xf32>,
    %cst_16 = arith.constant dense<0.000000e+00> : vector<16xf32>
    %27 = vector.multi_reduction <add>, %23, %cst_16 [0] : vector<8x16xf32> to vector<16xf32>
    %28 = vector.shape_cast %27 : vector<16xf32> to vector<1x16xf32>
    %29 = arith.mulf %23, %23 : vector<8x16xf32>
    %cst_17 = arith.constant dense<0.000000e+00> : vector<16xf32>
    %30 = vector.multi_reduction <add>, %29, %cst_17 [0] : vector<8x16xf32> to vector<16xf32>
    %31 = vector.shape_cast %30 : vector<16xf32> to vector<1x16xf32>
    %32 = tpu.concatenate %28, %31 in 0 : vector<1x16xf32>, vector<1x16xf32> -> vector<2x16xf32>
    %c0_18 = arith.constant 0 : index
    %c0_19 = arith.constant 0 : index
    %c0_20 = arith.constant 0 : index
    %c0_21 = arith.constant 0 : index
    %33 = vector.load %arg8[%c0_18, %c0_19, %c0_20, %c0_21] : memref<1x1x2x16xf32, #tpu.memory_space<vmem>>, vector<1x1x2x16xf32>
    %34 = vector.shape_cast %33 : vector<1x1x2x16xf32> to vector<2x16xf32>
    %35 = vector.shape_cast %32 : vector<2x16xf32> to vector<1x1x2x16xf32>
    tpu.vector_store %arg8[%c0_18, %c0_19, %c0_20, %c0_21], %35 {strides = array<i32>} : memref<1x1x2x16xf32, #tpu.memory_space<vmem>>, vector<1x1x2x16xf32>,
    return
  }
  func.func @transform_0(%arg0: i32, %arg1: i32) -> (i32, i32, i32) {
    %c0_i32 = arith.constant 0 : i32
    %c0_i32_0 = arith.constant 0 : i32
    %c0_i32_1 = arith.constant 0 : i32
    return %arg0, %c0_i32, %c0_i32_0 : i32, i32, i32
  }
  func.func @transform_1(%arg0: i32, %arg1: i32) -> (i32, i32) {
    %c0_i32 = arith.constant 0 : i32
    %c0_i32_0 = arith.constant 0 : i32
    %c0_i32_1 = arith.constant 0 : i32
    return %c0_i32, %c0_i32_0 : i32, i32
  }
  func.func @transform_2(%arg0: i32, %arg1: i32) -> (i32, i32) {
    %c0_i32 = arith.constant 0 : i32
    %c0_i32_0 = arith.constant 0 : i32
    %c0_i32_1 = arith.constant 0 : i32
    return %c0_i32, %c0_i32_0 : i32, i32
  }
  func.func @transform_3(%arg0: i32, %arg1: i32) -> (i32, i32, i32) {
    %c0_i32 = arith.constant 0 : i32
    %c0_i32_0 = arith.constant 0 : i32
    %c0_i32_1 = arith.constant 0 : i32
    %c0_i32_2 = arith.constant 0 : i32
    return %c0_i32, %c0_i32_0, %c0_i32_1 : i32, i32, i32
  }
  func.func @transform_4(%arg0: i32, %arg1: i32) -> (i32, i32) {
    %c0_i32 = arith.constant 0 : i32
    %c0_i32_0 = arith.constant 0 : i32
    %c0_i32_1 = arith.constant 0 : i32
    return %c0_i32, %c0_i32_0 : i32, i32
  }
  func.func @transform_5(%arg0: i32, %arg1: i32) -> (i32, i32, i32) {
    %c0_i32 = arith.constant 0 : i32
    %c0_i32_0 = arith.constant 0 : i32
    return %arg0, %arg1, %c0_i32 : i32, i32, i32
  }
  func.func @transform_6(%arg0: i32, %arg1: i32) -> (i32, i32, i32, i32) {
    %c0_i32 = arith.constant 0 : i32
    %c0_i32_0 = arith.constant 0 : i32
    %c0_i32_1 = arith.constant 0 : i32
    return %arg0, %arg1, %c0_i32, %c0_i32_0 : i32, i32, i32, i32
  }
}

module attributes {stable_mosaic.version = 11 : i64} {
  func.func @_conv_kernel(%arg0: i32, %arg1: i32, %arg2: memref<1x24x16xf32, #tpu.memory_space<vmem>>, %arg3: memref<1x16xf32, #tpu.memory_space<vmem>>, %arg4: memref<1x16xf32, #tpu.memory_space<vmem>>, %arg5: memref<3x16x16xf32, #tpu.memory_space<vmem>>, %arg6: memref<1x16xf32, #tpu.memory_space<vmem>>, %arg7: memref<1x8x16xf32, #tpu.memory_space<vmem>>, %arg8: memref<1x1x2x16xf32, #tpu.memory_space<vmem>>) attributes {dimension_semantics = [#tpu.dimension_semantics<parallel>, #tpu.dimension_semantics<parallel>], iteration_bounds = array<i64: 2, 2>, scalar_prefetch = 0 : i64, scratch_operands = 0 : i64, tpu.core_type = #tpu.core_type<tc>, window_params = [{transform_indices = @transform_0, window_bounds = array<i64: 1, 24, 16>}, {pipeline_mode = #tpu.pipeline_mode<synchronous>, transform_indices = @transform_1, window_bounds = array<i64: 1, 16>}, {pipeline_mode = #tpu.pipeline_mode<synchronous>, transform_indices = @transform_2, window_bounds = array<i64: 1, 16>}, {pipeline_mode = #tpu.pipeline_mode<synchronous>, transform_indices = @transform_3, window_bounds = array<i64: 3, 16, 16>}, {pipeline_mode = #tpu.pipeline_mode<synchronous>, transform_indices = @transform_4, window_bounds = array<i64: 1, 16>}, {transform_indices = @transform_5, window_bounds = array<i64: 1, 8, 16>}, {transform_indices = @transform_6, window_bounds = array<i64: 1, 1, 2, 16>}]} {
    %c8_i32 = arith.constant 8 : i32
    %0 = arith.muli %arg1, %c8_i32 : i32
    %1 = tpu.assume_multiple %0, 8 : i32
    %cst = arith.constant 0.000000e+00 : f32
    %2 = vector.broadcast %cst : f32 to vector<8x16xf32>
    %c0 = arith.constant 0 : index
    %3 = arith.index_cast %1 : i32 to index
    %c0_0 = arith.constant 0 : index
    %4 = vector.load %arg2[%c0, %3, %c0_0] : memref<1x24x16xf32, #tpu.memory_space<vmem>>, vector<1x16x16xf32>
    %5 = vector.shape_cast %4 : vector<1x16x16xf32> to vector<16x16xf32>
    %c0_1 = arith.constant 0 : index
    %c0_2 = arith.constant 0 : index
    %6 = vector.load %arg3[%c0_1, %c0_2] : memref<1x16xf32, #tpu.memory_space<vmem>>, vector<1x16xf32>
    %7 = vector.broadcast %6 : vector<1x16xf32> to vector<16x16xf32>
    %8 = arith.mulf %5, %7 : vector<16x16xf32>
    %c0_3 = arith.constant 0 : index
    %c0_4 = arith.constant 0 : index
    %9 = vector.load %arg4[%c0_3, %c0_4] : memref<1x16xf32, #tpu.memory_space<vmem>>, vector<1x16xf32>
    %10 = vector.broadcast %9 : vector<1x16xf32> to vector<16x16xf32>
    %11 = arith.addf %8, %10 : vector<16x16xf32>
    %cst_5 = arith.constant 0.000000e+00 : f32
    %12 = vector.broadcast %cst_5 : f32 to vector<16x16xf32>
    %13 = arith.subf %12, %11 : vector<16x16xf32>
    %14 = math.exp %13 : vector<16x16xf32>
    %cst_6 = arith.constant 1.000000e+00 : f32
    %15 = vector.broadcast %cst_6 : f32 to vector<16x16xf32>
    %16 = arith.addf %15, %14 : vector<16x16xf32>
    %cst_7 = arith.constant 1.000000e+00 : f32
    %17 = vector.broadcast %cst_7 : f32 to vector<16x16xf32>
    %18 = arith.divf %17, %16 : vector<16x16xf32>
    %19 = arith.mulf %11, %18 : vector<16x16xf32>
    %20 = vector.extract_strided_slice %19 {offsets = [0, 0], sizes = [8, 16], strides = [1, 1]} : vector<16x16xf32> to vector<8x16xf32>
    %c0_8 = arith.constant 0 : index
    %c0_9 = arith.constant 0 : index
    %c0_10 = arith.constant 0 : index
    %21 = vector.load %arg5[%c0_8, %c0_9, %c0_10] : memref<3x16x16xf32, #tpu.memory_space<vmem>>, vector<1x16x16xf32>
    %22 = vector.shape_cast %21 : vector<1x16x16xf32> to vector<16x16xf32>
    %cst_11 = arith.constant dense<0.000000e+00> : vector<8x16xf32>
    %23 = tpu.matmul %20, %22, %cst_11 {dimension_numbers = #tpu.dot_dimension_numbers<[1], [0], [0], [1], [0, 0, 1, 1], [], []>} : vector<8x16xf32>, vector<16x16xf32>, vector<8x16xf32> -> vector<8x16xf32>
    %24 = arith.addf %2, %23 : vector<8x16xf32>
    %25 = vector.extract_strided_slice %19 {offsets = [1, 0], sizes = [8, 16], strides = [1, 1]} : vector<16x16xf32> to vector<8x16xf32>
    %c1 = arith.constant 1 : index
    %c0_12 = arith.constant 0 : index
    %c0_13 = arith.constant 0 : index
    %26 = vector.load %arg5[%c1, %c0_12, %c0_13] : memref<3x16x16xf32, #tpu.memory_space<vmem>>, vector<1x16x16xf32>
    %27 = vector.shape_cast %26 : vector<1x16x16xf32> to vector<16x16xf32>
    %cst_14 = arith.constant dense<0.000000e+00> : vector<8x16xf32>
    %28 = tpu.matmul %25, %27, %cst_14 {dimension_numbers = #tpu.dot_dimension_numbers<[1], [0], [0], [1], [0, 0, 1, 1], [], []>} : vector<8x16xf32>, vector<16x16xf32>, vector<8x16xf32> -> vector<8x16xf32>
    %29 = arith.addf %24, %28 : vector<8x16xf32>
    %30 = vector.extract_strided_slice %19 {offsets = [2, 0], sizes = [8, 16], strides = [1, 1]} : vector<16x16xf32> to vector<8x16xf32>
    %c2 = arith.constant 2 : index
    %c0_15 = arith.constant 0 : index
    %c0_16 = arith.constant 0 : index
    %31 = vector.load %arg5[%c2, %c0_15, %c0_16] : memref<3x16x16xf32, #tpu.memory_space<vmem>>, vector<1x16x16xf32>
    %32 = vector.shape_cast %31 : vector<1x16x16xf32> to vector<16x16xf32>
    %cst_17 = arith.constant dense<0.000000e+00> : vector<8x16xf32>
    %33 = tpu.matmul %30, %32, %cst_17 {dimension_numbers = #tpu.dot_dimension_numbers<[1], [0], [0], [1], [0, 0, 1, 1], [], []>} : vector<8x16xf32>, vector<16x16xf32>, vector<8x16xf32> -> vector<8x16xf32>
    %34 = arith.addf %29, %33 : vector<8x16xf32>
    %c0_18 = arith.constant 0 : index
    %c0_19 = arith.constant 0 : index
    %35 = vector.load %arg6[%c0_18, %c0_19] : memref<1x16xf32, #tpu.memory_space<vmem>>, vector<1x16xf32>
    %36 = vector.broadcast %35 : vector<1x16xf32> to vector<8x16xf32>
    %37 = arith.addf %34, %36 : vector<8x16xf32>
    %c0_20 = arith.constant 0 : index
    %c0_21 = arith.constant 0 : index
    %c0_22 = arith.constant 0 : index
    %38 = vector.load %arg7[%c0_20, %c0_21, %c0_22] : memref<1x8x16xf32, #tpu.memory_space<vmem>>, vector<1x8x16xf32>
    %39 = vector.shape_cast %38 : vector<1x8x16xf32> to vector<8x16xf32>
    %40 = vector.shape_cast %37 : vector<8x16xf32> to vector<1x8x16xf32>
    tpu.vector_store %arg7[%c0_20, %c0_21, %c0_22], %40 {strides = array<i32>} : memref<1x8x16xf32, #tpu.memory_space<vmem>>, vector<1x8x16xf32>,
    %cst_23 = arith.constant dense<0.000000e+00> : vector<16xf32>
    %41 = vector.multi_reduction <add>, %37, %cst_23 [0] : vector<8x16xf32> to vector<16xf32>
    %42 = vector.shape_cast %41 : vector<16xf32> to vector<1x16xf32>
    %43 = arith.mulf %37, %37 : vector<8x16xf32>
    %cst_24 = arith.constant dense<0.000000e+00> : vector<16xf32>
    %44 = vector.multi_reduction <add>, %43, %cst_24 [0] : vector<8x16xf32> to vector<16xf32>
    %45 = vector.shape_cast %44 : vector<16xf32> to vector<1x16xf32>
    %46 = tpu.concatenate %42, %45 in 0 : vector<1x16xf32>, vector<1x16xf32> -> vector<2x16xf32>
    %c0_25 = arith.constant 0 : index
    %c0_26 = arith.constant 0 : index
    %c0_27 = arith.constant 0 : index
    %c0_28 = arith.constant 0 : index
    %47 = vector.load %arg8[%c0_25, %c0_26, %c0_27, %c0_28] : memref<1x1x2x16xf32, #tpu.memory_space<vmem>>, vector<1x1x2x16xf32>
    %48 = vector.shape_cast %47 : vector<1x1x2x16xf32> to vector<2x16xf32>
    %49 = vector.shape_cast %46 : vector<2x16xf32> to vector<1x1x2x16xf32>
    tpu.vector_store %arg8[%c0_25, %c0_26, %c0_27, %c0_28], %49 {strides = array<i32>} : memref<1x1x2x16xf32, #tpu.memory_space<vmem>>, vector<1x1x2x16xf32>,
    return
  }
  func.func @transform_0(%arg0: i32, %arg1: i32) -> (i32, i32, i32) {
    %c0_i32 = arith.constant 0 : i32
    %c0_i32_0 = arith.constant 0 : i32
    %c0_i32_1 = arith.constant 0 : i32
    return %arg0, %c0_i32, %c0_i32_0 : i32, i32, i32
  }
  func.func @transform_1(%arg0: i32, %arg1: i32) -> (i32, i32) {
    %c0_i32 = arith.constant 0 : i32
    %c0_i32_0 = arith.constant 0 : i32
    %c0_i32_1 = arith.constant 0 : i32
    return %c0_i32, %c0_i32_0 : i32, i32
  }
  func.func @transform_2(%arg0: i32, %arg1: i32) -> (i32, i32) {
    %c0_i32 = arith.constant 0 : i32
    %c0_i32_0 = arith.constant 0 : i32
    %c0_i32_1 = arith.constant 0 : i32
    return %c0_i32, %c0_i32_0 : i32, i32
  }
  func.func @transform_3(%arg0: i32, %arg1: i32) -> (i32, i32, i32) {
    %c0_i32 = arith.constant 0 : i32
    %c0_i32_0 = arith.constant 0 : i32
    %c0_i32_1 = arith.constant 0 : i32
    %c0_i32_2 = arith.constant 0 : i32
    return %c0_i32, %c0_i32_0, %c0_i32_1 : i32, i32, i32
  }
  func.func @transform_4(%arg0: i32, %arg1: i32) -> (i32, i32) {
    %c0_i32 = arith.constant 0 : i32
    %c0_i32_0 = arith.constant 0 : i32
    %c0_i32_1 = arith.constant 0 : i32
    return %c0_i32, %c0_i32_0 : i32, i32
  }
  func.func @transform_5(%arg0: i32, %arg1: i32) -> (i32, i32, i32) {
    %c0_i32 = arith.constant 0 : i32
    %c0_i32_0 = arith.constant 0 : i32
    return %arg0, %arg1, %c0_i32 : i32, i32, i32
  }
  func.func @transform_6(%arg0: i32, %arg1: i32) -> (i32, i32, i32, i32) {
    %c0_i32 = arith.constant 0 : i32
    %c0_i32_0 = arith.constant 0 : i32
    %c0_i32_1 = arith.constant 0 : i32
    return %arg0, %arg1, %c0_i32, %c0_i32_0 : i32, i32, i32, i32
  }
}

module attributes {stable_mosaic.version = 11 : i64} {
  func.func @_se_pool_kernel(%arg0: i32, %arg1: i32, %arg2: memref<1x8x16xf32, #tpu.memory_space<vmem>>, %arg3: memref<1x16xf32, #tpu.memory_space<vmem>>, %arg4: memref<1x16xf32, #tpu.memory_space<vmem>>, %arg5: memref<1x1x1x16xf32, #tpu.memory_space<vmem>>) attributes {dimension_semantics = [#tpu.dimension_semantics<parallel>, #tpu.dimension_semantics<parallel>], iteration_bounds = array<i64: 2, 2>, scalar_prefetch = 0 : i64, scratch_operands = 0 : i64, tpu.core_type = #tpu.core_type<tc>, window_params = [{transform_indices = @transform_0, window_bounds = array<i64: 1, 8, 16>}, {pipeline_mode = #tpu.pipeline_mode<synchronous>, transform_indices = @transform_1, window_bounds = array<i64: 1, 16>}, {pipeline_mode = #tpu.pipeline_mode<synchronous>, transform_indices = @transform_2, window_bounds = array<i64: 1, 16>}, {transform_indices = @transform_3, window_bounds = array<i64: 1, 1, 1, 16>}]} {
    %c0 = arith.constant 0 : index
    %c0_0 = arith.constant 0 : index
    %c0_1 = arith.constant 0 : index
    %0 = vector.load %arg2[%c0, %c0_0, %c0_1] : memref<1x8x16xf32, #tpu.memory_space<vmem>>, vector<1x8x16xf32>
    %1 = vector.shape_cast %0 : vector<1x8x16xf32> to vector<8x16xf32>
    %c0_2 = arith.constant 0 : index
    %c0_3 = arith.constant 0 : index
    %2 = vector.load %arg3[%c0_2, %c0_3] : memref<1x16xf32, #tpu.memory_space<vmem>>, vector<1x16xf32>
    %3 = vector.broadcast %2 : vector<1x16xf32> to vector<8x16xf32>
    %4 = arith.mulf %1, %3 : vector<8x16xf32>
    %c0_4 = arith.constant 0 : index
    %c0_5 = arith.constant 0 : index
    %5 = vector.load %arg4[%c0_4, %c0_5] : memref<1x16xf32, #tpu.memory_space<vmem>>, vector<1x16xf32>
    %6 = vector.broadcast %5 : vector<1x16xf32> to vector<8x16xf32>
    %7 = arith.addf %4, %6 : vector<8x16xf32>
    %cst = arith.constant 0.000000e+00 : f32
    %8 = vector.broadcast %cst : f32 to vector<8x16xf32>
    %9 = arith.subf %8, %7 : vector<8x16xf32>
    %10 = math.exp %9 : vector<8x16xf32>
    %cst_6 = arith.constant 1.000000e+00 : f32
    %11 = vector.broadcast %cst_6 : f32 to vector<8x16xf32>
    %12 = arith.addf %11, %10 : vector<8x16xf32>
    %cst_7 = arith.constant 1.000000e+00 : f32
    %13 = vector.broadcast %cst_7 : f32 to vector<8x16xf32>
    %14 = arith.divf %13, %12 : vector<8x16xf32>
    %15 = arith.mulf %7, %14 : vector<8x16xf32>
    %cst_8 = arith.constant dense<0.000000e+00> : vector<16xf32>
    %16 = vector.multi_reduction <add>, %15, %cst_8 [0] : vector<8x16xf32> to vector<16xf32>
    %17 = vector.shape_cast %16 : vector<16xf32> to vector<1x16xf32>
    %c0_9 = arith.constant 0 : index
    %c0_10 = arith.constant 0 : index
    %c0_11 = arith.constant 0 : index
    %c0_12 = arith.constant 0 : index
    %18 = vector.load %arg5[%c0_9, %c0_10, %c0_11, %c0_12] : memref<1x1x1x16xf32, #tpu.memory_space<vmem>>, vector<1x1x1x16xf32>
    %19 = vector.shape_cast %18 : vector<1x1x1x16xf32> to vector<1x16xf32>
    %20 = vector.shape_cast %17 : vector<1x16xf32> to vector<1x1x1x16xf32>
    tpu.vector_store %arg5[%c0_9, %c0_10, %c0_11, %c0_12], %20 {strides = array<i32>} : memref<1x1x1x16xf32, #tpu.memory_space<vmem>>, vector<1x1x1x16xf32>,
    return
  }
  func.func @transform_0(%arg0: i32, %arg1: i32) -> (i32, i32, i32) {
    %c0_i32 = arith.constant 0 : i32
    %c0_i32_0 = arith.constant 0 : i32
    return %arg0, %arg1, %c0_i32 : i32, i32, i32
  }
  func.func @transform_1(%arg0: i32, %arg1: i32) -> (i32, i32) {
    %c0_i32 = arith.constant 0 : i32
    %c0_i32_0 = arith.constant 0 : i32
    %c0_i32_1 = arith.constant 0 : i32
    return %c0_i32, %c0_i32_0 : i32, i32
  }
  func.func @transform_2(%arg0: i32, %arg1: i32) -> (i32, i32) {
    %c0_i32 = arith.constant 0 : i32
    %c0_i32_0 = arith.constant 0 : i32
    %c0_i32_1 = arith.constant 0 : i32
    return %c0_i32, %c0_i32_0 : i32, i32
  }
  func.func @transform_3(%arg0: i32, %arg1: i32) -> (i32, i32, i32, i32) {
    %c0_i32 = arith.constant 0 : i32
    %c0_i32_0 = arith.constant 0 : i32
    %c0_i32_1 = arith.constant 0 : i32
    return %arg0, %arg1, %c0_i32, %c0_i32_0 : i32, i32, i32, i32
  }
}

module attributes {stable_mosaic.version = 11 : i64} {
  func.func @_gate_res_kernel(%arg0: i32, %arg1: i32, %arg2: memref<1x8x16xf32, #tpu.memory_space<vmem>>, %arg3: memref<1x16xf32, #tpu.memory_space<vmem>>, %arg4: memref<1x16xf32, #tpu.memory_space<vmem>>, %arg5: memref<1x1x16xf32, #tpu.memory_space<vmem>>, %arg6: memref<1x8x16xf32, #tpu.memory_space<vmem>>, %arg7: memref<1x16xf32, #tpu.memory_space<vmem>>, %arg8: memref<1x16xf32, #tpu.memory_space<vmem>>, %arg9: memref<1x8x16xf32, #tpu.memory_space<vmem>>) attributes {dimension_semantics = [#tpu.dimension_semantics<parallel>, #tpu.dimension_semantics<parallel>], iteration_bounds = array<i64: 2, 2>, scalar_prefetch = 0 : i64, scratch_operands = 0 : i64, tpu.core_type = #tpu.core_type<tc>, window_params = [{transform_indices = @transform_0, window_bounds = array<i64: 1, 8, 16>}, {pipeline_mode = #tpu.pipeline_mode<synchronous>, transform_indices = @transform_1, window_bounds = array<i64: 1, 16>}, {pipeline_mode = #tpu.pipeline_mode<synchronous>, transform_indices = @transform_2, window_bounds = array<i64: 1, 16>}, {transform_indices = @transform_3, window_bounds = array<i64: 1, 1, 16>}, {transform_indices = @transform_4, window_bounds = array<i64: 1, 8, 16>}, {pipeline_mode = #tpu.pipeline_mode<synchronous>, transform_indices = @transform_5, window_bounds = array<i64: 1, 16>}, {pipeline_mode = #tpu.pipeline_mode<synchronous>, transform_indices = @transform_6, window_bounds = array<i64: 1, 16>}, {transform_indices = @transform_7, window_bounds = array<i64: 1, 8, 16>}]} {
    %c0 = arith.constant 0 : index
    %c0_0 = arith.constant 0 : index
    %c0_1 = arith.constant 0 : index
    %0 = vector.load %arg2[%c0, %c0_0, %c0_1] : memref<1x8x16xf32, #tpu.memory_space<vmem>>, vector<1x8x16xf32>
    %1 = vector.shape_cast %0 : vector<1x8x16xf32> to vector<8x16xf32>
    %c0_2 = arith.constant 0 : index
    %c0_3 = arith.constant 0 : index
    %2 = vector.load %arg3[%c0_2, %c0_3] : memref<1x16xf32, #tpu.memory_space<vmem>>, vector<1x16xf32>
    %3 = vector.broadcast %2 : vector<1x16xf32> to vector<8x16xf32>
    %4 = arith.mulf %1, %3 : vector<8x16xf32>
    %c0_4 = arith.constant 0 : index
    %c0_5 = arith.constant 0 : index
    %5 = vector.load %arg4[%c0_4, %c0_5] : memref<1x16xf32, #tpu.memory_space<vmem>>, vector<1x16xf32>
    %6 = vector.broadcast %5 : vector<1x16xf32> to vector<8x16xf32>
    %7 = arith.addf %4, %6 : vector<8x16xf32>
    %cst = arith.constant 0.000000e+00 : f32
    %8 = vector.broadcast %cst : f32 to vector<8x16xf32>
    %9 = arith.subf %8, %7 : vector<8x16xf32>
    %10 = math.exp %9 : vector<8x16xf32>
    %cst_6 = arith.constant 1.000000e+00 : f32
    %11 = vector.broadcast %cst_6 : f32 to vector<8x16xf32>
    %12 = arith.addf %11, %10 : vector<8x16xf32>
    %cst_7 = arith.constant 1.000000e+00 : f32
    %13 = vector.broadcast %cst_7 : f32 to vector<8x16xf32>
    %14 = arith.divf %13, %12 : vector<8x16xf32>
    %15 = arith.mulf %7, %14 : vector<8x16xf32>
    %c0_8 = arith.constant 0 : index
    %c0_9 = arith.constant 0 : index
    %c0_10 = arith.constant 0 : index
    %16 = vector.load %arg6[%c0_8, %c0_9, %c0_10] : memref<1x8x16xf32, #tpu.memory_space<vmem>>, vector<1x8x16xf32>
    %17 = vector.shape_cast %16 : vector<1x8x16xf32> to vector<8x16xf32>
    %c0_11 = arith.constant 0 : index
    %c0_12 = arith.constant 0 : index
    %18 = vector.load %arg7[%c0_11, %c0_12] : memref<1x16xf32, #tpu.memory_space<vmem>>, vector<1x16xf32>
    %19 = vector.broadcast %18 : vector<1x16xf32> to vector<8x16xf32>
    %20 = arith.mulf %17, %19 : vector<8x16xf32>
    %c0_13 = arith.constant 0 : index
    %c0_14 = arith.constant 0 : index
    %21 = vector.load %arg8[%c0_13, %c0_14] : memref<1x16xf32, #tpu.memory_space<vmem>>, vector<1x16xf32>
    %22 = vector.broadcast %21 : vector<1x16xf32> to vector<8x16xf32>
    %23 = arith.addf %20, %22 : vector<8x16xf32>
    %c0_15 = arith.constant 0 : index
    %c0_16 = arith.constant 0 : index
    %c0_17 = arith.constant 0 : index
    %24 = vector.load %arg5[%c0_15, %c0_16, %c0_17] : memref<1x1x16xf32, #tpu.memory_space<vmem>>, vector<1x1x16xf32>
    %25 = vector.shape_cast %24 : vector<1x1x16xf32> to vector<1x16xf32>
    %26 = vector.broadcast %25 : vector<1x16xf32> to vector<8x16xf32>
    %27 = arith.mulf %15, %26 : vector<8x16xf32>
    %28 = arith.addf %27, %23 : vector<8x16xf32>
    %cst_18 = arith.constant 0.000000e+00 : f32
    %29 = vector.broadcast %cst_18 : f32 to vector<8x16xf32>
    %30 = arith.subf %29, %28 : vector<8x16xf32>
    %31 = math.exp %30 : vector<8x16xf32>
    %cst_19 = arith.constant 1.000000e+00 : f32
    %32 = vector.broadcast %cst_19 : f32 to vector<8x16xf32>
    %33 = arith.addf %32, %31 : vector<8x16xf32>
    %cst_20 = arith.constant 1.000000e+00 : f32
    %34 = vector.broadcast %cst_20 : f32 to vector<8x16xf32>
    %35 = arith.divf %34, %33 : vector<8x16xf32>
    %36 = arith.mulf %28, %35 : vector<8x16xf32>
    %c0_21 = arith.constant 0 : index
    %c0_22 = arith.constant 0 : index
    %c0_23 = arith.constant 0 : index
    %37 = vector.load %arg9[%c0_21, %c0_22, %c0_23] : memref<1x8x16xf32, #tpu.memory_space<vmem>>, vector<1x8x16xf32>
    %38 = vector.shape_cast %37 : vector<1x8x16xf32> to vector<8x16xf32>
    %39 = vector.shape_cast %36 : vector<8x16xf32> to vector<1x8x16xf32>
    tpu.vector_store %arg9[%c0_21, %c0_22, %c0_23], %39 {strides = array<i32>} : memref<1x8x16xf32, #tpu.memory_space<vmem>>, vector<1x8x16xf32>,
    return
  }
  func.func @transform_0(%arg0: i32, %arg1: i32) -> (i32, i32, i32) {
    %c0_i32 = arith.constant 0 : i32
    %c0_i32_0 = arith.constant 0 : i32
    return %arg0, %arg1, %c0_i32 : i32, i32, i32
  }
  func.func @transform_1(%arg0: i32, %arg1: i32) -> (i32, i32) {
    %c0_i32 = arith.constant 0 : i32
    %c0_i32_0 = arith.constant 0 : i32
    %c0_i32_1 = arith.constant 0 : i32
    return %c0_i32, %c0_i32_0 : i32, i32
  }
  func.func @transform_2(%arg0: i32, %arg1: i32) -> (i32, i32) {
    %c0_i32 = arith.constant 0 : i32
    %c0_i32_0 = arith.constant 0 : i32
    %c0_i32_1 = arith.constant 0 : i32
    return %c0_i32, %c0_i32_0 : i32, i32
  }
  func.func @transform_3(%arg0: i32, %arg1: i32) -> (i32, i32, i32) {
    %c0_i32 = arith.constant 0 : i32
    %c0_i32_0 = arith.constant 0 : i32
    %c0_i32_1 = arith.constant 0 : i32
    return %arg0, %c0_i32, %c0_i32_0 : i32, i32, i32
  }
  func.func @transform_4(%arg0: i32, %arg1: i32) -> (i32, i32, i32) {
    %c0_i32 = arith.constant 0 : i32
    %c0_i32_0 = arith.constant 0 : i32
    return %arg0, %arg1, %c0_i32 : i32, i32, i32
  }
  func.func @transform_5(%arg0: i32, %arg1: i32) -> (i32, i32) {
    %c0_i32 = arith.constant 0 : i32
    %c0_i32_0 = arith.constant 0 : i32
    %c0_i32_1 = arith.constant 0 : i32
    return %c0_i32, %c0_i32_0 : i32, i32
  }
  func.func @transform_6(%arg0: i32, %arg1: i32) -> (i32, i32) {
    %c0_i32 = arith.constant 0 : i32
    %c0_i32_0 = arith.constant 0 : i32
    %c0_i32_1 = arith.constant 0 : i32
    return %c0_i32, %c0_i32_0 : i32, i32
  }
  func.func @transform_7(%arg0: i32, %arg1: i32) -> (i32, i32, i32) {
    %c0_i32 = arith.constant 0 : i32
    %c0_i32_0 = arith.constant 0 : i32
    return %arg0, %arg1, %c0_i32 : i32, i32, i32
  }
}

</mosaic_0001>

<llo_original>
// kernel: contextnet_block_forward.10
$region0: #{contextnet_block_forward.10}
  #allocation0 [shape = 'u32[]', space=smem, size = 0x4, offset = 0x4, fixed_abs, tag = 'smem constant byte address 0x4 - core index']
  #allocation1 [shape = 'u32[144,128]{1,0:T(1,128)}', space=vmem, size = 0x12000, scoped, tag = 'internal scratch']
  %s0 = inlined_call_operand.vmem [shape: f32[2,24,8], index: 0, kind: input, shape index: {}]
  %s1 = inlined_call_operand.vmem [shape: f32[1,8], index: 1, kind: input, shape index: {}]
  %s2 = inlined_call_operand.vmem [shape: f32[1,8], index: 2, kind: input, shape index: {}]
  %s3 = inlined_call_operand.vmem [shape: f32[3,8,16], index: 3, kind: input, shape index: {}]
  %s4 = inlined_call_operand.vmem [shape: f32[1,16], index: 4, kind: input, shape index: {}]
  %s5 = inlined_call_operand.vmem [shape: f32[2,16,16], index: 5, kind: output, shape index: {0}]
  %s6 = inlined_call_operand.vmem [shape: f32[2,2,2,16], index: 6, kind: output, shape index: {1}]
  %7 = xla_tuple %s5, %s6
  %s8 = sld [smem:[#allocation0]]
  $region61: #{contextnet_block_forward.10} parent=0
    _
  %s10 = ssub.s32 1, %s8
  %s11 = scalar_select 0, %s10, %s8
  loop: start=0, step=1, limit=6
  $region2: #{contextnet_block_forward.10} parent=0 // loop_pre_header
    _
  $region3: #{contextnet_block_forward.10} parent=0 // loop_header
    %s13 = sphi 0, %s17
    %p14 = scmp.ge.s32.totalorder %s13, 6
    %s20 = sphi 0, %s32
    %s21 = sphi 0, %s28
    %s22 = sphi 0, %s20
    %s23 = sphi 0, %s21
    %s24 = sphi 0, %s22
    %s25 = sphi 0, %s23
    %s35 = sphi 0, %s37
    %s38 = sphi 0, %s35
    %s39 = sphi 0, %s38
    %s55 = sphi 0, %s39
    %s59 = sphi 0, %s59
    %s61 = sphi 0, %s59
    %s62 = sphi 0, %s61
    %s76 = sphi 0, %s62
    %s80 = sphi 0, %s80
    %s82 = sphi 0, %s80
    %s83 = sphi 0, %s82
    %s97 = sphi 0, %s83
    %s101 = sphi 0, %s101
    %s103 = sphi 0, %s101
    %s104 = sphi 0, %s103
    %s118 = sphi 0, %s104
    %s122 = sphi 0, %s122
    %s124 = sphi 0, %s122
    %s125 = sphi 0, %s124
    %s139 = sphi 0, %s125
    %s147 = sphi 0, %s149
    %s150 = sphi 0, %s147
    %s151 = sphi 0, %s150
    %s167 = sphi 0, %s151
    %s175 = sphi 0, %s177
    %s178 = sphi 0, %s175
    %s179 = sphi 0, %s178
    %s195 = sphi 0, %s179
  $region4: #{contextnet_block_forward.10} parent=0 // loop_header_branch
    %16 = sbr.rel (%p14) target = $region8
  $region5: #{contextnet_block_forward.10} parent=0 // loop_body
    %s18 = ssub.s32 %s13, 1
    %s19 = ssub.s32 %s13, 2
    %s26 = sadd.s32 1, %s21
    %p27 = scmp.ge.s32.totalorder %s26, 2
    %s28 = scalar_select %p27, 0, %s26
    %s29 = sadd.s32 1, %s20
    %s30 = scalar_select %p27, %s29, %s20
    %p31 = scmp.ge.s32.totalorder %s30, 2
    %s32 = scalar_select %p31, 0, %s30
    %s33 = ssub.s32 %s20, %s32
    %p34 = scmp.eq.s32.totalorder %s33, 0
    %s36 = sadd.s32 %s35, 1
    %s37 = scalar_select %p34, %s35, %s36
    %p40 = pneg %p34
    %p41 = scmp.eq.s32.totalorder %s13, 3
    %p42 = por %p40, %p41
    %p43 = scmp.ne.s32.totalorder %s35, %s38
    %p44 = scmp.eq.s32.totalorder %s13, 0
    %p45 = por %p43, %p44
    %p46 = scmp.ne.s32.totalorder %s35, %s38
    %p47 = scmp.eq.s32.totalorder %s18, 3
    %p48 = por %p46, %p47
    %p49 = scmp.ne.s32.totalorder %s38, %s39
    %p50 = scmp.eq.s32.totalorder %s18, 0
    %p51 = por %p49, %p50
    %p52 = scmp.ne.s32.totalorder %s38, %s39
    %p53 = scmp.eq.s32.totalorder %s19, 3
    %p54 = por %p52, %p53
    %p56 = scmp.ne.s32.totalorder %s39, %s55
    %p57 = scmp.eq.s32.totalorder %s19, 0
    %p58 = por %p56, %p57
    %s60 = sadd.s32 %s59, 1
    %p63 = scmp.eq.s32.totalorder %s13, 3
    %p64 = scmp.ne.s32.totalorder %s59, %s61
    %p65 = scmp.eq.s32.totalorder %s13, 0
    %p66 = por %p64, %p65
    %p67 = scmp.ne.s32.totalorder %s59, %s61
    %p68 = scmp.eq.s32.totalorder %s18, 3
    %p69 = por %p67, %p68
    %p70 = scmp.ne.s32.totalorder %s61, %s62
    %p71 = scmp.eq.s32.totalorder %s18, 0
    %p72 = por %p70, %p71
    %p73 = scmp.ne.s32.totalorder %s61, %s62
    %p74 = scmp.eq.s32.totalorder %s19, 3
    %p75 = por %p73, %p74
    %p77 = scmp.ne.s32.totalorder %s62, %s76
    %p78 = scmp.eq.s32.totalorder %s19, 0
    %p79 = por %p77, %p78
    %s81 = sadd.s32 %s80, 1
    %p84 = scmp.eq.s32.totalorder %s13, 3
    %p85 = scmp.ne.s32.totalorder %s80, %s82
    %p86 = scmp.eq.s32.totalorder %s13, 0
    %p87 = por %p85, %p86
    %p88 = scmp.ne.s32.totalorder %s80, %s82
    %p89 = scmp.eq.s32.totalorder %s18, 3
    %p90 = por %p88, %p89
    %p91 = scmp.ne.s32.totalorder %s82, %s83
    %p92 = scmp.eq.s32.totalorder %s18, 0
    %p93 = por %p91, %p92
    %p94 = scmp.ne.s32.totalorder %s82, %s83
    %p95 = scmp.eq.s32.totalorder %s19, 3
    %p96 = por %p94, %p95
    %p98 = scmp.ne.s32.totalorder %s83, %s97
    %p99 = scmp.eq.s32.totalorder %s19, 0
    %p100 = por %p98, %p99
    %s102 = sadd.s32 %s101, 1
    %p105 = scmp.eq.s32.totalorder %s13, 3
    %p106 = scmp.ne.s32.totalorder %s101, %s103
    %p107 = scmp.eq.s32.totalorder %s13, 0
    %p108 = por %p106, %p107
    %p109 = scmp.ne.s32.totalorder %s101, %s103
    %p110 = scmp.eq.s32.totalorder %s18, 3
    %p111 = por %p109, %p110
    %p112 = scmp.ne.s32.totalorder %s103, %s104
    %p113 = scmp.eq.s32.totalorder %s18, 0
    %p114 = por %p112, %p113
    %p115 = scmp.ne.s32.totalorder %s103, %s104
    %p116 = scmp.eq.s32.totalorder %s19, 3
    %p117 = por %p115, %p116
    %p119 = scmp.ne.s32.totalorder %s104, %s118
    %p120 = scmp.eq.s32.totalorder %s19, 0
    %p121 = por %p119, %p120
    %s123 = sadd.s32 %s122, 1
    %p126 = scmp.eq.s32.totalorder %s13, 3
    %p127 = scmp.ne.s32.totalorder %s122, %s124
    %p128 = scmp.eq.s32.totalorder %s13, 0
    %p129 = por %p127, %p128
    %p130 = scmp.ne.s32.totalorder %s122, %s124
    %p131 = scmp.eq.s32.totalorder %s18, 3
    %p132 = por %p130, %p131
    %p133 = scmp.ne.s32.totalorder %s124, %s125
    %p134 = scmp.eq.s32.totalorder %s18, 0
    %p135 = por %p133, %p134
    %p136 = scmp.ne.s32.totalorder %s124, %s125
    %p137 = scmp.eq.s32.totalorder %s19, 3
    %p138 = por %p136, %p137
    %p140 = scmp.ne.s32.totalorder %s125, %s139
    %p141 = scmp.eq.s32.totalorder %s19, 0
    %p142 = por %p140, %p141
    %s143 = ssub.s32 %s20, %s32
    %s144 = ssub.s32 %s21, %s28
    %s145 = sor.u32 %s143, %s144
    %p146 = scmp.eq.s32.totalorder %s145, 0
    %s148 = sadd.s32 %s147, 1
    %s149 = scalar_select %p146, %s147, %s148
    %p152 = pneg %p146
    %p153 = scmp.eq.s32.totalorder %s13, 3
    %p154 = por %p152, %p153
    %p155 = scmp.ne.s32.totalorder %s147, %s150
    %p156 = scmp.eq.s32.totalorder %s13, 0
    %p157 = por %p155, %p156
    %p158 = scmp.ne.s32.totalorder %s147, %s150
    %p159 = scmp.eq.s32.totalorder %s18, 3
    %p160 = por %p158, %p159
    %p161 = scmp.ne.s32.totalorder %s150, %s151
    %p162 = scmp.eq.s32.totalorder %s18, 0
    %p163 = por %p161, %p162
    %p164 = scmp.ne.s32.totalorder %s150, %s151
    %p165 = scmp.eq.s32.totalorder %s19, 3
    %p166 = por %p164, %p165
    %p168 = scmp.ne.s32.totalorder %s151, %s167
    %p169 = scmp.eq.s32.totalorder %s19, 0
    %p170 = por %p168, %p169
    %s171 = ssub.s32 %s20, %s32
    %s172 = ssub.s32 %s21, %s28
    %s173 = sor.u32 %s171, %s172
    %p174 = scmp.eq.s32.totalorder %s173, 0
    %s176 = sadd.s32 %s175, 1
    %s177 = scalar_select %p174, %s175, %s176
    %p180 = pneg %p174
    %p181 = scmp.eq.s32.totalorder %s13, 3
    %p182 = por %p180, %p181
    %p183 = scmp.ne.s32.totalorder %s175, %s178
    %p184 = scmp.eq.s32.totalorder %s13, 0
    %p185 = por %p183, %p184
    %p186 = scmp.ne.s32.totalorder %s175, %s178
    %p187 = scmp.eq.s32.totalorder %s18, 3
    %p188 = por %p186, %p187
    %p189 = scmp.ne.s32.totalorder %s178, %s179
    %p190 = scmp.eq.s32.totalorder %s18, 0
    %p191 = por %p189, %p190
    %p192 = scmp.ne.s32.totalorder %s178, %s179
    %p193 = scmp.eq.s32.totalorder %s19, 3
    %p194 = por %p192, %p193
    %p196 = scmp.ne.s32.totalorder %s179, %s195
    %p197 = scmp.eq.s32.totalorder %s19, 0
    %p198 = por %p196, %p197
    %p199 = scmp.le.s32.totalorder 1, %s13
    %p200 = scmp.lt.s32.totalorder %s13, 5
    %p201 = pnand %p199, %p200
    %p202 = pneg %p201
    // Predicated region
    $region9: #{contextnet_block_forward.10} parent=5 // pred_check
      _
    $region10: #{contextnet_block_forward.10} parent=5 // pred_check_branch
      %204 = sbr.rel (%p201) target = $region12
    $region11: #{contextnet_block_forward.10} parent=5 // pred_region
      %s205 = ssub.s32 %s13, 1
      // Predicated region
      $region13: #{contextnet_block_forward.10} parent=11 // pred_check
        %p206 = pneg %p72
      $region14: #{contextnet_block_forward.10} parent=11 // pred_check_branch
        %208 = sbr.rel (%p206) target = $region16
      $region15: #{contextnet_block_forward.10} parent=11 // pred_region
        _
      $region16: #{contextnet_block_forward.10} parent=11 // pred_fallthru
        _
      // Predicated region
      $region17: #{contextnet_block_forward.10} parent=11 // pred_check
        %p209 = pneg %p93
      $region18: #{contextnet_block_forward.10} parent=11 // pred_check_branch
        %211 = sbr.rel (%p209) target = $region20
      $region19: #{contextnet_block_forward.10} parent=11 // pred_region
        _
      $region20: #{contextnet_block_forward.10} parent=11 // pred_fallthru
        _
      // Predicated region
      $region21: #{contextnet_block_forward.10} parent=11 // pred_check
        %p212 = pneg %p114
      $region22: #{contextnet_block_forward.10} parent=11 // pred_check_branch
        %214 = sbr.rel (%p212) target = $region24
      $region23: #{contextnet_block_forward.10} parent=11 // pred_region
        _
      $region24: #{contextnet_block_forward.10} parent=11 // pred_fallthru
        _
      // Predicated region
      $region25: #{contextnet_block_forward.10} parent=11 // pred_check
        %p215 = pneg %p135
      $region26: #{contextnet_block_forward.10} parent=11 // pred_check_branch
        %217 = sbr.rel (%p215) target = $region28
      $region27: #{contextnet_block_forward.10} parent=11 // pred_region
        _
      $region28: #{contextnet_block_forward.10} parent=11 // pred_fallthru
        _
    $region12: #{contextnet_block_forward.10} parent=5 // pred_fallthru
      _
    %p218 = scmp.lt.s32.totalorder %s13, 4
    // Predicated region
    $region29: #{contextnet_block_forward.10} parent=5 // pred_check
      %p219 = pneg %p218
    $region30: #{contextnet_block_forward.10} parent=5 // pred_check_branch
      %221 = sbr.rel (%p219) target = $region32
    $region31: #{contextnet_block_forward.10} parent=5 // pred_region
      // Predicated region
      $region33: #{contextnet_block_forward.10} parent=31 // pred_check
        %p222 = pneg %p45
      $region34: #{contextnet_block_forward.10} parent=31 // pred_check_branch
        %224 = sbr.rel (%p222) target = $region36
      $region35: #{contextnet_block_forward.10} parent=31 // pred_region
        %p225 = scmp.lt.s32.totalorder %s20, 1
        %s226 = scalar_select %p225, %s20, 1
        %s227 = smul.addr %s226, 3
        %s228 = smul.addr %s227, 8
        %s229 = scalar_lea.vmem %s0, %s228
      $region36: #{contextnet_block_forward.10} parent=31 // pred_fallthru
        _
    $region32: #{contextnet_block_forward.10} parent=5 // pred_fallthru
      _
    %p230 = scmp.le.s32.totalorder 1, %s13
    %p231 = scmp.lt.s32.totalorder %s13, 5
    %p232 = pnand %p230, %p231
    %p233 = pneg %p232
    // Predicated region
    $region37: #{contextnet_block_forward.10} parent=5 // pred_check
      _
    $region38: #{contextnet_block_forward.10} parent=5 // pred_check_branch
      %235 = sbr.rel (%p232) target = $region40
    $region39: #{contextnet_block_forward.10} parent=5 // pred_region
      %s236 = ssub.s32 %s13, 1
      %p237 = scmp.lt.s32.totalorder %s22, 1
      %s238 = scalar_select %p237, %s22, 1
      %s239 = smul.addr %s238, 3
      %s240 = smul.addr %s239, 8
      %s241 = scalar_lea.vmem %s0, %s240
      %p242 = pneg %p51
      %p243 = pneg %p48
      %p244 = pneg %p72
      %p245 = pneg %p69
      %p246 = pneg %p93
      %p247 = pneg %p90
      %p248 = pneg %p114
      %p249 = pneg %p111
      %p250 = pneg %p135
      %p251 = pneg %p132
      %p252 = pneg %p163
      %p253 = pneg %p160
      %p254 = scmp.lt.s32.totalorder %s22, 1
      %s255 = scalar_select %p254, %s22, 1
      %p256 = scmp.lt.s32.totalorder %s23, 1
      %s257 = scalar_select %p256, %s23, 1
      %s258 = smul.addr %s255, 2
      %s259 = sadd.s32 %s257, %s258
      %s260 = smul.addr %s259, 8
      %s261 = scalar_lea.vmem %s5, %s260
      %p262 = pneg %p191
      %p263 = pneg %p188
      %p264 = scmp.lt.s32.totalorder %s22, 1
      %s265 = scalar_select %p264, %s22, 1
      %p266 = scmp.lt.s32.totalorder %s23, 1
      %s267 = scalar_select %p266, %s23, 1
      %s268 = smul.addr %s265, 2
      %s269 = sadd.s32 %s267, %s268
      %s270 = smul.addr %s269, 2
      %s271 = scalar_lea.vmem %s6, %s270
      %p272 = scmp.lt.s32.totalorder %s22, 1
      %s273 = scalar_select %p272, %s22, 1
      %s274 = smul.addr %s273, 3
      %s275 = smul.addr %s274, 8
      %s276 = scalar_lea.vmem %s0, %s275
      %p277 = scmp.lt.s32.totalorder %s22, 1
      %s278 = scalar_select %p277, %s22, 1
      %p279 = scmp.lt.s32.totalorder %s23, 1
      %s280 = scalar_select %p279, %s23, 1
      %s281 = smul.addr %s278, 2
      %s282 = sadd.s32 %s280, %s281
      %s283 = smul.addr %s282, 8
      %s284 = scalar_lea.vmem %s5, %s283
      %p285 = scmp.lt.s32.totalorder %s22, 1
      %s286 = scalar_select %p285, %s22, 1
      %p287 = scmp.lt.s32.totalorder %s23, 1
      %s288 = scalar_select %p287, %s23, 1
      %s289 = smul.addr %s286, 2
      %s290 = sadd.s32 %s288, %s289
      %s291 = smul.addr %s290, 2
      %s292 = scalar_lea.vmem %s6, %s291
      %s293 = smul.u32 %s23, 8
      %s294 = scalar_lea.vmem %s276, %s293
      %v295 = vld [vmem:[%s294] sm:$0xff]
      %v296 = vld [vmem:[%s294 + $0x8] sm:$0xff]
      %v297 = vld [vmem:[%s3] sm:$0xff]
      %s298 = scalar_lea.vmem %s3, 8
      %v299 = vld [vmem:[%s298] sm:$0xff]
      %vm302 = vcmask 1046528
      %v303 = vrot.slane %v295, 1
      %v304 = vrot.slane %v296, 1
      %v305 = vsel %vm302, %v303, %v304
      %vm306 = vcmask 64512
      %v307 = vsel %vm306, %v305, 0
      %309 = vmatprep.subr.mxu0 0.0
      %310 = vmatpush1.msra.mxu0 0.0
      %311 = vmatprep.subr.mxu0 0.0
      %312 = vmatpush1.msra.mxu0 0.0
      %313 = vmatprep.subr.mxu0 0.0
      %314 = vmatpush1.msra.mxu0 0.0
      %315 = vmatprep.subr.mxu0 0.0
      %316 = vmatpush1.msra.mxu0 0.0
      %317 = vmatprep.subr.mxu0 0.0
      %318 = vmatpush1.msra.mxu0 0.0
      %319 = vmatprep.subr.mxu0 0.0
      %320 = vmatpush1.msra.mxu0 0.0
      %321 = vmatprep.subr.mxu0 0.0
      %322 = vmatpush1.msra.mxu0 0.0
      %323 = vmatprep.subr.mxu0 0.0
      %324 = vmatpush1.msra.mxu0 0.0
      %325 = vmatprep.subr.mxu0 0.0
      %326 = vmatpush1.msra.mxu0 0.0
      %327 = vmatprep.subr.mxu0 0.0
      %328 = vmatpush1.msra.mxu0 0.0
      %329 = vmatprep.subr.mxu0 0.0
      %330 = vmatpush1.msra.mxu0 0.0
      %331 = vmatprep.subr.mxu0 0.0
      %332 = vmatpush1.msra.mxu0 0.0
      %333 = vmatprep.subr.mxu0 0.0
      %334 = vmatpush1.msra.mxu0 0.0
      %335 = vmatprep.subr.mxu0 0.0
      %336 = vmatpush1.msra.mxu0 0.0
      %337 = vmatprep.subr.mxu0 0.0
      %338 = vmatpush1.msra.mxu0 0.0
      %339 = vmatprep.subr.mxu0 0.0
      %340 = vmatpush1.msra.mxu0 %v299
      %341 = vmatprep.subr.mxu0 0.0
      %342 = vmatpush2.msra.mxu0 0.0
      %343 = vmatprep.subr.mxu0 0.0
      %344 = vmatpush2.msra.mxu0 0.0
      %345 = vmatprep.subr.mxu0 0.0
      %346 = vmatpush2.msra.mxu0 0.0
      %347 = vmatprep.subr.mxu0 0.0
      %348 = vmatpush2.msra.mxu0 0.0
      %349 = vmatprep.subr.mxu0 0.0
      %350 = vmatpush2.msra.mxu0 0.0
      %351 = vmatprep.subr.mxu0 0.0
      %352 = vmatpush2.msra.mxu0 0.0
      %353 = vmatprep.subr.mxu0 0.0
      %354 = vmatpush2.msra.mxu0 0.0
      %355 = vmatprep.subr.mxu0 0.0
      %356 = vmatpush2.msra.mxu0 0.0
      %357 = vmatprep.subr.mxu0 0.0
      %358 = vmatpush2.msra.mxu0 0.0
      %359 = vmatprep.subr.mxu0 0.0
      %360 = vmatpush2.msra.mxu0 0.0
      %361 = vmatprep.subr.mxu0 0.0
      %362 = vmatpush2.msra.mxu0 0.0
      %363 = vmatprep.subr.mxu0 0.0
      %364 = vmatpush2.msra.mxu0 0.0
      %365 = vmatprep.subr.mxu0 0.0
      %366 = vmatpush2.msra.mxu0 0.0
      %367 = vmatprep.subr.mxu0 0.0
      %368 = vmatpush2.msra.mxu0 0.0
      %369 = vmatprep.subr.mxu0 0.0
      %370 = vmatpush2.msra.mxu0 0.0
      %371 = vmatprep.subr.mxu0 0.0
      %372 = vmatpush2.msra.mxu0 0.0
      %373 = vmatprep.mubr.f32.mxu0 0.0
      %374 = vmatmul.mubr.f32.gmra.mxu0 %v307
      %v375 = vpop.f32.mrf.mxu0
      %v376 = vadd.f32 0.0, %v375
      %v377 = vpop.f32.mrf.mxu0
      %378 = vdwg.mxu0
      %v379 = vsel %vm306, %v295, 0
      %381 = vmatprep.subr.mxu0 0.0
      %382 = vmatpush1.msra.mxu0 0.0
      %383 = vmatprep.subr.mxu0 0.0
      %384 = vmatpush1.msra.mxu0 0.0
      %385 = vmatprep.subr.mxu0 0.0
      %386 = vmatpush1.msra.mxu0 0.0
      %387 = vmatprep.subr.mxu0 0.0
      %388 = vmatpush1.msra.mxu0 0.0
      %389 = vmatprep.subr.mxu0 0.0
      %390 = vmatpush1.msra.mxu0 0.0
      %391 = vmatprep.subr.mxu0 0.0
      %392 = vmatpush1.msra.mxu0 0.0
      %393 = vmatprep.subr.mxu0 0.0
      %394 = vmatpush1.msra.mxu0 0.0
      %395 = vmatprep.subr.mxu0 0.0
      %396 = vmatpush1.msra.mxu0 0.0
      %397 = vmatprep.subr.mxu0 0.0
      %398 = vmatpush1.msra.mxu0 0.0
      %399 = vmatprep.subr.mxu0 0.0
      %400 = vmatpush1.msra.mxu0 0.0
      %401 = vmatprep.subr.mxu0 0.0
      %402 = vmatpush1.msra.mxu0 0.0
      %403 = vmatprep.subr.mxu0 0.0
      %404 = vmatpush1.msra.mxu0 0.0
      %405 = vmatprep.subr.mxu0 0.0
      %406 = vmatpush1.msra.mxu0 0.0
      %407 = vmatprep.subr.mxu0 0.0
      %408 = vmatpush1.msra.mxu0 0.0
      %409 = vmatprep.subr.mxu0 0.0
      %410 = vmatpush1.msra.mxu0 0.0
      %411 = vmatprep.subr.mxu0 0.0
      %412 = vmatpush1.msra.mxu0 %v297
      %413 = vmatprep.subr.mxu0 0.0
      %414 = vmatpush2.msra.mxu0 0.0
      %415 = vmatprep.subr.mxu0 0.0
      %416 = vmatpush2.msra.mxu0 0.0
      %417 = vmatprep.subr.mxu0 0.0
      %418 = vmatpush2.msra.mxu0 0.0
      %419 = vmatprep.subr.mxu0 0.0
      %420 = vmatpush2.msra.mxu0 0.0
      %421 = vmatprep.subr.mxu0 0.0
      %422 = vmatpush2.msra.mxu0 0.0
      %423 = vmatprep.subr.mxu0 0.0
      %424 = vmatpush2.msra.mxu0 0.0
      %425 = vmatprep.subr.mxu0 0.0
      %426 = vmatpush2.msra.mxu0 0.0
      %427 = vmatprep.subr.mxu0 0.0
      %428 = vmatpush2.msra.mxu0 0.0
      %429 = vmatprep.subr.mxu0 0.0
      %430 = vmatpush2.msra.mxu0 0.0
      %431 = vmatprep.subr.mxu0 0.0
      %432 = vmatpush2.msra.mxu0 0.0
      %433 = vmatprep.subr.mxu0 0.0
      %434 = vmatpush2.msra.mxu0 0.0
      %435 = vmatprep.subr.mxu0 0.0
      %436 = vmatpush2.msra.mxu0 0.0
      %437 = vmatprep.subr.mxu0 0.0
      %438 = vmatpush2.msra.mxu0 0.0
      %439 = vmatprep.subr.mxu0 0.0
      %440 = vmatpush2.msra.mxu0 0.0
      %441 = vmatprep.subr.mxu0 0.0
      %442 = vmatpush2.msra.mxu0 0.0
      %443 = vmatprep.subr.mxu0 0.0
      %444 = vmatpush2.msra.mxu0 0.0
      %445 = vmatprep.mubr.f32.mxu0 0.0
      %446 = vmatmul.mubr.f32.gmra.mxu0 %v379
      %v447 = vpop.f32.mrf.mxu0
      %v448 = vadd.f32 %v376, %v447
      %v449 = vpop.f32.mrf.mxu0
      %450 = vdwg.mxu0
      %s451 = scalar_lea.vmem %s3, 16
      %v452 = vld [vmem:[%s451] sm:$0xff]
      %vm453 = vcmask 1045504
      %v454 = vrot.slane %v295, 2
      %v455 = vrot.slane %v296, 2
      %v456 = vsel %vm453, %v454, %v455
      %v457 = vsel %vm306, %v456, 0
      %459 = vmatprep.subr.mxu0 0.0
      %460 = vmatpush1.msra.mxu0 0.0
      %461 = vmatprep.subr.mxu0 0.0
      %462 = vmatpush1.msra.mxu0 0.0
      %463 = vmatprep.subr.mxu0 0.0
      %464 = vmatpush1.msra.mxu0 0.0
      %465 = vmatprep.subr.mxu0 0.0
      %466 = vmatpush1.msra.mxu0 0.0
      %467 = vmatprep.subr.mxu0 0.0
      %468 = vmatpush1.msra.mxu0 0.0
      %469 = vmatprep.subr.mxu0 0.0
      %470 = vmatpush1.msra.mxu0 0.0
      %471 = vmatprep.subr.mxu0 0.0
      %472 = vmatpush1.msra.mxu0 0.0
      %473 = vmatprep.subr.mxu0 0.0
      %474 = vmatpush1.msra.mxu0 0.0
      %475 = vmatprep.subr.mxu0 0.0
      %476 = vmatpush1.msra.mxu0 0.0
      %477 = vmatprep.subr.mxu0 0.0
      %478 = vmatpush1.msra.mxu0 0.0
      %479 = vmatprep.subr.mxu0 0.0
      %480 = vmatpush1.msra.mxu0 0.0
      %481 = vmatprep.subr.mxu0 0.0
      %482 = vmatpush1.msra.mxu0 0.0
      %483 = vmatprep.subr.mxu0 0.0
      %484 = vmatpush1.msra.mxu0 0.0
      %485 = vmatprep.subr.mxu0 0.0
      %486 = vmatpush1.msra.mxu0 0.0
      %487 = vmatprep.subr.mxu0 0.0
      %488 = vmatpush1.msra.mxu0 0.0
      %489 = vmatprep.subr.mxu0 0.0
      %490 = vmatpush1.msra.mxu0 %v452
      %491 = vmatprep.subr.mxu0 0.0
      %492 = vmatpush2.msra.mxu0 0.0
      %493 = vmatprep.subr.mxu0 0.0
      %494 = vmatpush2.msra.mxu0 0.0
      %495 = vmatprep.subr.mxu0 0.0
      %496 = vmatpush2.msra.mxu0 0.0
      %497 = vmatprep.subr.mxu0 0.0
      %498 = vmatpush2.msra.mxu0 0.0
      %499 = vmatprep.subr.mxu0 0.0
      %500 = vmatpush2.msra.mxu0 0.0
      %501 = vmatprep.subr.mxu0 0.0
      %502 = vmatpush2.msra.mxu0 0.0
      %503 = vmatprep.subr.mxu0 0.0
      %504 = vmatpush2.msra.mxu0 0.0
      %505 = vmatprep.subr.mxu0 0.0
      %506 = vmatpush2.msra.mxu0 0.0
      %507 = vmatprep.subr.mxu0 0.0
      %508 = vmatpush2.msra.mxu0 0.0
      %509 = vmatprep.subr.mxu0 0.0
      %510 = vmatpush2.msra.mxu0 0.0
      %511 = vmatprep.subr.mxu0 0.0
      %512 = vmatpush2.msra.mxu0 0.0
      %513 = vmatprep.subr.mxu0 0.0
      %514 = vmatpush2.msra.mxu0 0.0
      %515 = vmatprep.subr.mxu0 0.0
      %516 = vmatpush2.msra.mxu0 0.0
      %517 = vmatprep.subr.mxu0 0.0
      %518 = vmatpush2.msra.mxu0 0.0
      %519 = vmatprep.subr.mxu0 0.0
      %520 = vmatpush2.msra.mxu0 0.0
      %521 = vmatprep.subr.mxu0 0.0
      %522 = vmatpush2.msra.mxu0 0.0
      %523 = vmatprep.mubr.f32.mxu0 0.0
      %524 = vmatmul.mubr.f32.gmra.mxu0 %v457
      %v525 = vpop.f32.mrf.mxu0
      %v526 = vadd.f32 0.0, %v525
      %v527 = vpop.f32.mrf.mxu0
      %528 = vdwg.mxu0
      %v529 = vadd.f32 %v448, %v526
      %v530 = vld [vmem:[%s4] sm:$0x1]
      %v532 = vlaneseq
      %v533 = vshrl.u32 %v532, 7
      %v534 = vsub.s32 0, %v533
      %v535 = vrot.slane %v530, %v534
      %v537 = vadd.f32 %v529, %v535
      %vm538 = vcmask 130048
      %539 = vst.msk [vmem:[%s284] sm:$0xff] %vm538, %v537
      %v540 = vsel %vm538, %v537, 0.0
      %v541 = vrot.slane %v540, 4
      %v542 = vadd.f32 %v540, %v541
      %v543 = vrot.slane %v542, 2
      %v544 = vadd.f32 %v542, %v543
      %v545 = vrot.slane %v544, 1
      %v546 = vadd.f32 %v544, %v545
      %v547 = vmul.f32 %v537, %v537
      %v548 = vsel %vm538, %v547, 0.0
      %v549 = vrot.slane %v548, 4
      %v550 = vadd.f32 %v548, %v549
      %v551 = vrot.slane %v550, 2
      %v552 = vadd.f32 %v550, %v551
      %v553 = vrot.slane %v552, 1
      %v554 = vadd.f32 %v552, %v553
      %vm555 = vcmask 1040384
      %v556 = vsel %vm555, %v546, %v554
      %vm557 = vcmask 123904
      %558 = vst.msk [vmem:[%s292] sm:$0x3] %vm557, %v556
      %p559 = scmp.lt.s32.totalorder %s22, 1
      %s560 = scalar_select %p559, %s22, 1
      %p561 = scmp.lt.s32.totalorder %s23, 1
      %s562 = scalar_select %p561, %s23, 1
      %s563 = smul.addr %s560, 2
      %s564 = sadd.s32 %s562, %s563
      %s565 = smul.addr %s564, 8
      %s566 = scalar_lea.vmem %s5, %s565
      %p567 = scmp.lt.s32.totalorder %s22, 1
      %s568 = scalar_select %p567, %s22, 1
      %p569 = scmp.lt.s32.totalorder %s23, 1
      %s570 = scalar_select %p569, %s23, 1
      %s571 = smul.addr %s568, 2
      %s572 = sadd.s32 %s570, %s571
      %s573 = smul.addr %s572, 2
      %s574 = scalar_lea.vmem %s6, %s573
      // Predicated region
      $region41: #{contextnet_block_forward.10} parent=39 // pred_check
        %p575 = pneg %p160
      $region42: #{contextnet_block_forward.10} parent=39 // pred_check_branch
        %577 = sbr.rel (%p575) target = $region44
      $region43: #{contextnet_block_forward.10} parent=39 // pred_region
        _
      $region44: #{contextnet_block_forward.10} parent=39 // pred_fallthru
        _
      // Predicated region
      $region45: #{contextnet_block_forward.10} parent=39 // pred_check
        %p578 = pneg %p188
      $region46: #{contextnet_block_forward.10} parent=39 // pred_check_branch
        %580 = sbr.rel (%p578) target = $region48
      $region47: #{contextnet_block_forward.10} parent=39 // pred_region
        _
      $region48: #{contextnet_block_forward.10} parent=39 // pred_fallthru
        _
    $region40: #{contextnet_block_forward.10} parent=5 // pred_fallthru
      _
    %p581 = scmp.le.s32.totalorder 2, %s13
    // Predicated region
    $region49: #{contextnet_block_forward.10} parent=5 // pred_check
      %p582 = pneg %p581
    $region50: #{contextnet_block_forward.10} parent=5 // pred_check_branch
      %584 = sbr.rel (%p582) target = $region52
    $region51: #{contextnet_block_forward.10} parent=5 // pred_region
      %s585 = ssub.s32 %s13, 2
      // Predicated region
      $region53: #{contextnet_block_forward.10} parent=51 // pred_check
        %p586 = pneg %p166
      $region54: #{contextnet_block_forward.10} parent=51 // pred_check_branch
        %588 = sbr.rel (%p586) target = $region56
      $region55: #{contextnet_block_forward.10} parent=51 // pred_region
        %p589 = scmp.lt.s32.totalorder %s24, 1
        %s590 = scalar_select %p589, %s24, 1
        %p591 = scmp.lt.s32.totalorder %s25, 1
        %s592 = scalar_select %p591, %s25, 1
        %s593 = smul.addr %s590, 2
        %s594 = sadd.s32 %s592, %s593
        %s595 = smul.addr %s594, 8
        %s596 = scalar_lea.vmem %s5, %s595
      $region56: #{contextnet_block_forward.10} parent=51 // pred_fallthru
        _
      // Predicated region
      $region57: #{contextnet_block_forward.10} parent=51 // pred_check
        %p597 = pneg %p194
      $region58: #{contextnet_block_forward.10} parent=51 // pred_check_branch
        %599 = sbr.rel (%p597) target = $region60
      $region59: #{contextnet_block_forward.10} parent=51 // pred_region
        %p600 = scmp.lt.s32.totalorder %s24, 1
        %s601 = scalar_select %p600, %s24, 1
        %p602 = scmp.lt.s32.totalorder %s25, 1
        %s603 = scalar_select %p602, %s25, 1
        %s604 = smul.addr %s601, 2
        %s605 = sadd.s32 %s603, %s604
        %s606 = smul.addr %s605, 2
        %s607 = scalar_lea.vmem %s6, %s606
      $region60: #{contextnet_block_forward.10} parent=51 // pred_fallthru
        _
    $region52: #{contextnet_block_forward.10} parent=5 // pred_fallthru
      _
  $region6: #{contextnet_block_forward.10} parent=0 // loop_footer
    %s17 = sadd.s32 1, %s13
  $region7: #{contextnet_block_forward.10} parent=0 // loop_footer_branch
    %12 = sbr.rel target = $region3
  $region8: #{contextnet_block_forward.10} parent=0 // loop_exit
    _

// kernel: contextnet_block_forward.9
$region0: #{contextnet_block_forward.9}
  #allocation0 [shape = 'u32[]', space=smem, size = 0x4, offset = 0x4, fixed_abs, tag = 'smem constant byte address 0x4 - core index']
  #allocation1 [shape = 'u32[144,128]{1,0:T(1,128)}', space=vmem, size = 0x12000, scoped, tag = 'internal scratch']
  %s0 = inlined_call_operand.vmem [shape: f32[2,16,16], index: 0, kind: input, shape index: {}]
  %s1 = inlined_call_operand.vmem [shape: f32[1,16], index: 1, kind: input, shape index: {}]
  %s2 = inlined_call_operand.vmem [shape: f32[1,16], index: 2, kind: input, shape index: {}]
  %s3 = inlined_call_operand.vmem [shape: f32[2,2,1,16], index: 3, kind: output, shape index: {}]
  %s4 = sld [smem:[#allocation0]]
  $region45: #{contextnet_block_forward.9} parent=0
    _
  %s6 = ssub.s32 1, %s4
  %s7 = scalar_select 0, %s6, %s4
  loop: start=0, step=1, limit=6
  $region2: #{contextnet_block_forward.9} parent=0 // loop_pre_header
    _
  $region3: #{contextnet_block_forward.9} parent=0 // loop_header
    %s9 = sphi 0, %s13
    %p10 = scmp.ge.s32.totalorder %s9, 6
    %s16 = sphi 0, %s28
    %s17 = sphi 0, %s24
    %s18 = sphi 0, %s16
    %s19 = sphi 0, %s17
    %s20 = sphi 0, %s18
    %s21 = sphi 0, %s19
    %s33 = sphi 0, %s35
    %s36 = sphi 0, %s33
    %s37 = sphi 0, %s36
    %s53 = sphi 0, %s37
    %s57 = sphi 0, %s57
    %s59 = sphi 0, %s57
    %s60 = sphi 0, %s59
    %s74 = sphi 0, %s60
    %s78 = sphi 0, %s78
    %s80 = sphi 0, %s78
    %s81 = sphi 0, %s80
    %s95 = sphi 0, %s81
    %s103 = sphi 0, %s105
    %s106 = sphi 0, %s103
    %s107 = sphi 0, %s106
    %s123 = sphi 0, %s107
  $region4: #{contextnet_block_forward.9} parent=0 // loop_header_branch
    %12 = sbr.rel (%p10) target = $region8
  $region5: #{contextnet_block_forward.9} parent=0 // loop_body
    %s14 = ssub.s32 %s9, 1
    %s15 = ssub.s32 %s9, 2
    %s22 = sadd.s32 1, %s17
    %p23 = scmp.ge.s32.totalorder %s22, 2
    %s24 = scalar_select %p23, 0, %s22
    %s25 = sadd.s32 1, %s16
    %s26 = scalar_select %p23, %s25, %s16
    %p27 = scmp.ge.s32.totalorder %s26, 2
    %s28 = scalar_select %p27, 0, %s26
    %s29 = ssub.s32 %s16, %s28
    %s30 = ssub.s32 %s17, %s24
    %s31 = sor.u32 %s29, %s30
    %p32 = scmp.eq.s32.totalorder %s31, 0
    %s34 = sadd.s32 %s33, 1
    %s35 = scalar_select %p32, %s33, %s34
    %p38 = pneg %p32
    %p39 = scmp.eq.s32.totalorder %s9, 3
    %p40 = por %p38, %p39
    %p41 = scmp.ne.s32.totalorder %s33, %s36
    %p42 = scmp.eq.s32.totalorder %s9, 0
    %p43 = por %p41, %p42
    %p44 = scmp.ne.s32.totalorder %s33, %s36
    %p45 = scmp.eq.s32.totalorder %s14, 3
    %p46 = por %p44, %p45
    %p47 = scmp.ne.s32.totalorder %s36, %s37
    %p48 = scmp.eq.s32.totalorder %s14, 0
    %p49 = por %p47, %p48
    %p50 = scmp.ne.s32.totalorder %s36, %s37
    %p51 = scmp.eq.s32.totalorder %s15, 3
    %p52 = por %p50, %p51
    %p54 = scmp.ne.s32.totalorder %s37, %s53
    %p55 = scmp.eq.s32.totalorder %s15, 0
    %p56 = por %p54, %p55
    %s58 = sadd.s32 %s57, 1
    %p61 = scmp.eq.s32.totalorder %s9, 3
    %p62 = scmp.ne.s32.totalorder %s57, %s59
    %p63 = scmp.eq.s32.totalorder %s9, 0
    %p64 = por %p62, %p63
    %p65 = scmp.ne.s32.totalorder %s57, %s59
    %p66 = scmp.eq.s32.totalorder %s14, 3
    %p67 = por %p65, %p66
    %p68 = scmp.ne.s32.totalorder %s59, %s60
    %p69 = scmp.eq.s32.totalorder %s14, 0
    %p70 = por %p68, %p69
    %p71 = scmp.ne.s32.totalorder %s59, %s60
    %p72 = scmp.eq.s32.totalorder %s15, 3
    %p73 = por %p71, %p72
    %p75 = scmp.ne.s32.totalorder %s60, %s74
    %p76 = scmp.eq.s32.totalorder %s15, 0
    %p77 = por %p75, %p76
    %s79 = sadd.s32 %s78, 1
    %p82 = scmp.eq.s32.totalorder %s9, 3
    %p83 = scmp.ne.s32.totalorder %s78, %s80
    %p84 = scmp.eq.s32.totalorder %s9, 0
    %p85 = por %p83, %p84
    %p86 = scmp.ne.s32.totalorder %s78, %s80
    %p87 = scmp.eq.s32.totalorder %s14, 3
    %p88 = por %p86, %p87
    %p89 = scmp.ne.s32.totalorder %s80, %s81
    %p90 = scmp.eq.s32.totalorder %s14, 0
    %p91 = por %p89, %p90
    %p92 = scmp.ne.s32.totalorder %s80, %s81
    %p93 = scmp.eq.s32.totalorder %s15, 3
    %p94 = por %p92, %p93
    %p96 = scmp.ne.s32.totalorder %s81, %s95
    %p97 = scmp.eq.s32.totalorder %s15, 0
    %p98 = por %p96, %p97
    %s99 = ssub.s32 %s16, %s28
    %s100 = ssub.s32 %s17, %s24
    %s101 = sor.u32 %s99, %s100
    %p102 = scmp.eq.s32.totalorder %s101, 0
    %s104 = sadd.s32 %s103, 1
    %s105 = scalar_select %p102, %s103, %s104
    %p108 = pneg %p102
    %p109 = scmp.eq.s32.totalorder %s9, 3
    %p110 = por %p108, %p109
    %p111 = scmp.ne.s32.totalorder %s103, %s106
    %p112 = scmp.eq.s32.totalorder %s9, 0
    %p113 = por %p111, %p112
    %p114 = scmp.ne.s32.totalorder %s103, %s106
    %p115 = scmp.eq.s32.totalorder %s14, 3
    %p116 = por %p114, %p115
    %p117 = scmp.ne.s32.totalorder %s106, %s107
    %p118 = scmp.eq.s32.totalorder %s14, 0
    %p119 = por %p117, %p118
    %p120 = scmp.ne.s32.totalorder %s106, %s107
    %p121 = scmp.eq.s32.totalorder %s15, 3
    %p122 = por %p120, %p121
    %p124 = scmp.ne.s32.totalorder %s107, %s123
    %p125 = scmp.eq.s32.totalorder %s15, 0
    %p126 = por %p124, %p125
    %p127 = scmp.le.s32.totalorder 1, %s9
    %p128 = scmp.lt.s32.totalorder %s9, 5
    %p129 = pnand %p127, %p128
    %p130 = pneg %p129
    // Predicated region
    $region9: #{contextnet_block_forward.9} parent=5 // pred_check
      _
    $region10: #{contextnet_block_forward.9} parent=5 // pred_check_branch
      %132 = sbr.rel (%p129) target = $region12
    $region11: #{contextnet_block_forward.9} parent=5 // pred_region
      %s133 = ssub.s32 %s9, 1
      // Predicated region
      $region13: #{contextnet_block_forward.9} parent=11 // pred_check
        %p134 = pneg %p70
      $region14: #{contextnet_block_forward.9} parent=11 // pred_check_branch
        %136 = sbr.rel (%p134) target = $region16
      $region15: #{contextnet_block_forward.9} parent=11 // pred_region
        _
      $region16: #{contextnet_block_forward.9} parent=11 // pred_fallthru
        _
      // Predicated region
      $region17: #{contextnet_block_forward.9} parent=11 // pred_check
        %p137 = pneg %p91
      $region18: #{contextnet_block_forward.9} parent=11 // pred_check_branch
        %139 = sbr.rel (%p137) target = $region20
      $region19: #{contextnet_block_forward.9} parent=11 // pred_region
        _
      $region20: #{contextnet_block_forward.9} parent=11 // pred_fallthru
        _
    $region12: #{contextnet_block_forward.9} parent=5 // pred_fallthru
      _
    %p140 = scmp.lt.s32.totalorder %s9, 4
    // Predicated region
    $region21: #{contextnet_block_forward.9} parent=5 // pred_check
      %p141 = pneg %p140
    $region22: #{contextnet_block_forward.9} parent=5 // pred_check_branch
      %143 = sbr.rel (%p141) target = $region24
    $region23: #{contextnet_block_forward.9} parent=5 // pred_region
      // Predicated region
      $region25: #{contextnet_block_forward.9} parent=23 // pred_check
        %p144 = pneg %p43
      $region26: #{contextnet_block_forward.9} parent=23 // pred_check_branch
        %146 = sbr.rel (%p144) target = $region28
      $region27: #{contextnet_block_forward.9} parent=23 // pred_region
        %p147 = scmp.lt.s32.totalorder %s16, 1
        %s148 = scalar_select %p147, %s16, 1
        %p149 = scmp.lt.s32.totalorder %s17, 1
        %s150 = scalar_select %p149, %s17, 1
        %s151 = smul.addr %s148, 2
        %s152 = sadd.s32 %s150, %s151
        %s153 = smul.addr %s152, 8
        %s154 = scalar_lea.vmem %s0, %s153
      $region28: #{contextnet_block_forward.9} parent=23 // pred_fallthru
        _
    $region24: #{contextnet_block_forward.9} parent=5 // pred_fallthru
      _
    %p155 = scmp.le.s32.totalorder 1, %s9
    %p156 = scmp.lt.s32.totalorder %s9, 5
    %p157 = pnand %p155, %p156
    %p158 = pneg %p157
    // Predicated region
    $region29: #{contextnet_block_forward.9} parent=5 // pred_check
      _
    $region30: #{contextnet_block_forward.9} parent=5 // pred_check_branch
      %160 = sbr.rel (%p157) target = $region32
    $region31: #{contextnet_block_forward.9} parent=5 // pred_region
      %s161 = ssub.s32 %s9, 1
      %p162 = scmp.lt.s32.totalorder %s18, 1
      %s163 = scalar_select %p162, %s18, 1
      %p164 = scmp.lt.s32.totalorder %s19, 1
      %s165 = scalar_select %p164, %s19, 1
      %s166 = smul.addr %s163, 2
      %s167 = sadd.s32 %s165, %s166
      %s168 = smul.addr %s167, 8
      %s169 = scalar_lea.vmem %s0, %s168
      %p170 = pneg %p49
      %p171 = pneg %p46
      %p172 = pneg %p70
      %p173 = pneg %p67
      %p174 = pneg %p91
      %p175 = pneg %p88
      %p176 = pneg %p119
      %p177 = pneg %p116
      %p178 = scmp.lt.s32.totalorder %s18, 1
      %s179 = scalar_select %p178, %s18, 1
      %p180 = scmp.lt.s32.totalorder %s19, 1
      %s181 = scalar_select %p180, %s19, 1
      %s182 = smul.addr %s179, 2
      %s183 = sadd.s32 %s181, %s182
      %s184 = scalar_lea.vmem %s3, %s183
      %p185 = scmp.lt.s32.totalorder %s18, 1
      %s186 = scalar_select %p185, %s18, 1
      %p187 = scmp.lt.s32.totalorder %s19, 1
      %s188 = scalar_select %p187, %s19, 1
      %s189 = smul.addr %s186, 2
      %s190 = sadd.s32 %s188, %s189
      %s191 = smul.addr %s190, 8
      %s192 = scalar_lea.vmem %s0, %s191
      %p193 = scmp.lt.s32.totalorder %s18, 1
      %s194 = scalar_select %p193, %s18, 1
      %p195 = scmp.lt.s32.totalorder %s19, 1
      %s196 = scalar_select %p195, %s19, 1
      %s197 = smul.addr %s194, 2
      %s198 = sadd.s32 %s196, %s197
      %s199 = scalar_lea.vmem %s3, %s198
      %v200 = vld [vmem:[%s192] sm:$0xff]
      %v201 = vld [vmem:[%s1] sm:$0x1]
      %v203 = vlaneseq
      %v204 = vshrl.u32 %v203, 7
      %v205 = vsub.s32 0, %v204
      %v206 = vrot.slane %v201, %v205
      %v208 = vmul.f32 %v200, %v206
      %v209 = vld [vmem:[%s2] sm:$0x1]
      %v211 = vlaneseq
      %v212 = vshrl.u32 %v211, 7
      %v213 = vsub.s32 0, %v212
      %v214 = vrot.slane %v209, %v213
      %v216 = vadd.f32 %v208, %v214
      %v217 = vsub.f32 0.0, %v216
      %v218 = vmul.f32 %v217, 1.442695
      %v219 = vpow.pop %v218
      %v220 = vadd.f32 %v219, 1.0
      %v221 = vrcp.pop %v220
      %v222 = vmul.f32 1.0, %v221
      %v223 = vmul.f32 %v216, %v222
      %vm224 = vcmask 130048
      %v225 = vsel %vm224, %v223, 0.0
      %v226 = vrot.slane %v225, 4
      %v227 = vadd.f32 %v225, %v226
      %v228 = vrot.slane %v227, 2
      %v229 = vadd.f32 %v227, %v228
      %v230 = vrot.slane %v229, 1
      %v231 = vadd.f32 %v229, %v230
      %vm232 = vcmask 122880
      %233 = vst.msk [vmem:[%s199] sm:$0x1] %vm232, %v231
      %p234 = scmp.lt.s32.totalorder %s18, 1
      %s235 = scalar_select %p234, %s18, 1
      %p236 = scmp.lt.s32.totalorder %s19, 1
      %s237 = scalar_select %p236, %s19, 1
      %s238 = smul.addr %s235, 2
      %s239 = sadd.s32 %s237, %s238
      %s240 = scalar_lea.vmem %s3, %s239
      // Predicated region
      $region33: #{contextnet_block_forward.9} parent=31 // pred_check
        %p241 = pneg %p116
      $region34: #{contextnet_block_forward.9} parent=31 // pred_check_branch
        %243 = sbr.rel (%p241) target = $region36
      $region35: #{contextnet_block_forward.9} parent=31 // pred_region
        _
      $region36: #{contextnet_block_forward.9} parent=31 // pred_fallthru
        _
    $region32: #{contextnet_block_forward.9} parent=5 // pred_fallthru
      _
    %p244 = scmp.le.s32.totalorder 2, %s9
    // Predicated region
    $region37: #{contextnet_block_forward.9} parent=5 // pred_check
      %p245 = pneg %p244
    $region38: #{contextnet_block_forward.9} parent=5 // pred_check_branch
      %247 = sbr.rel (%p245) target = $region40
    $region39: #{contextnet_block_forward.9} parent=5 // pred_region
      %s248 = ssub.s32 %s9, 2
      // Predicated region
      $region41: #{contextnet_block_forward.9} parent=39 // pred_check
        %p249 = pneg %p122
      $region42: #{contextnet_block_forward.9} parent=39 // pred_check_branch
        %251 = sbr.rel (%p249) target = $region44
      $region43: #{contextnet_block_forward.9} parent=39 // pred_region
        %p252 = scmp.lt.s32.totalorder %s20, 1
        %s253 = scalar_select %p252, %s20, 1
        %p254 = scmp.lt.s32.totalorder %s21, 1
        %s255 = scalar_select %p254, %s21, 1
        %s256 = smul.addr %s253, 2
        %s257 = sadd.s32 %s255, %s256
        %s258 = scalar_lea.vmem %s3, %s257
      $region44: #{contextnet_block_forward.9} parent=39 // pred_fallthru
        _
    $region40: #{contextnet_block_forward.9} parent=5 // pred_fallthru
      _
  $region6: #{contextnet_block_forward.9} parent=0 // loop_footer
    %s13 = sadd.s32 1, %s9
  $region7: #{contextnet_block_forward.9} parent=0 // loop_footer_branch
    %8 = sbr.rel target = $region3
  $region8: #{contextnet_block_forward.9} parent=0 // loop_exit
    _

// kernel: contextnet_block_forward.11
$region0: #{contextnet_block_forward.11}
  #allocation0 [shape = 'u32[]', space=smem, size = 0x4, offset = 0x4, fixed_abs, tag = 'smem constant byte address 0x4 - core index']
  #allocation1 [shape = 'u32[144,128]{1,0:T(1,128)}', space=vmem, size = 0x12000, scoped, tag = 'internal scratch']
  %s0 = inlined_call_operand.vmem [shape: f32[2,16,16], index: 0, kind: input, shape index: {}]
  %s1 = inlined_call_operand.vmem [shape: f32[1,16], index: 1, kind: input, shape index: {}]
  %s2 = inlined_call_operand.vmem [shape: f32[1,16], index: 2, kind: input, shape index: {}]
  %s3 = inlined_call_operand.vmem [shape: f32[2,1,16], index: 3, kind: input, shape index: {}]
  %s4 = inlined_call_operand.vmem [shape: f32[2,16,16], index: 4, kind: input, shape index: {}]
  %s5 = inlined_call_operand.vmem [shape: f32[1,16], index: 5, kind: input, shape index: {}]
  %s6 = inlined_call_operand.vmem [shape: f32[1,16], index: 6, kind: input, shape index: {}]
  %s7 = inlined_call_operand.hbm [shape: f32[2,16,16], index: 7, kind: output, shape index: {}]
  %s8 = sld [smem:[#allocation0]]
  $region61: #{contextnet_block_forward.11} parent=0
    _
  %s10 = ssub.s32 1, %s8
  %s11 = scalar_select 0, %s10, %s8
  $region1: #{contextnet_block_forward.11} parent=0
    #allocation2 [shape = 'u8[8192]{0}', space=vmem, size = 0x2000, scoped, tag = 'output window, operand 0']
    #allocation3 [shape = 's32[2]{0}', space=sflag, size = 0x8, scoped, tag = 'scoped memory for contextnet_block_forward.11']
    %12 = vsyncpa [#allocation3], 0
    %s13 = scalar_lea.sflag [#allocation3], 1
    %14 = vsyncpa %s13, 0
    loop: start=0, step=1, limit=6
    $region2: #{contextnet_block_forward.11} parent=1 // loop_pre_header
      _
    $region3: #{contextnet_block_forward.11} parent=1 // loop_header
      %s16 = sphi 0, %s20
      %p17 = scmp.ge.s32.totalorder %s16, 6
      %s23 = sphi 0, %s35
      %s24 = sphi 0, %s31
      %s25 = sphi 0, %s23
      %s26 = sphi 0, %s24
      %s27 = sphi 0, %s25
      %s28 = sphi 0, %s26
      %s40 = sphi 0, %s42
      %s43 = sphi 0, %s40
      %s44 = sphi 0, %s43
      %s60 = sphi 0, %s44
      %s64 = sphi 0, %s64
      %s66 = sphi 0, %s64
      %s67 = sphi 0, %s66
      %s81 = sphi 0, %s67
      %s85 = sphi 0, %s85
      %s87 = sphi 0, %s85
      %s88 = sphi 0, %s87
      %s102 = sphi 0, %s88
      %s108 = sphi 0, %s110
      %s111 = sphi 0, %s108
      %s112 = sphi 0, %s111
      %s128 = sphi 0, %s112
      %s136 = sphi 0, %s138
      %s139 = sphi 0, %s136
      %s140 = sphi 0, %s139
      %s156 = sphi 0, %s140
      %s160 = sphi 0, %s160
      %s162 = sphi 0, %s160
      %s163 = sphi 0, %s162
      %s177 = sphi 0, %s163
      %s181 = sphi 0, %s181
      %s183 = sphi 0, %s181
      %s184 = sphi 0, %s183
      %s198 = sphi 0, %s184
      %s206 = sphi 0, %s208
      %s209 = sphi 0, %s206
      %s210 = sphi 0, %s209
      %s226 = sphi 0, %s210
    $region4: #{contextnet_block_forward.11} parent=1 // loop_header_branch
      %19 = sbr.rel (%p17) target = $region8
    $region5: #{contextnet_block_forward.11} parent=1 // loop_body
      %s21 = ssub.s32 %s16, 1
      %s22 = ssub.s32 %s16, 2
      %s29 = sadd.s32 1, %s24
      %p30 = scmp.ge.s32.totalorder %s29, 2
      %s31 = scalar_select %p30, 0, %s29
      %s32 = sadd.s32 1, %s23
      %s33 = scalar_select %p30, %s32, %s23
      %p34 = scmp.ge.s32.totalorder %s33, 2
      %s35 = scalar_select %p34, 0, %s33
      %s36 = ssub.s32 %s23, %s35
      %s37 = ssub.s32 %s24, %s31
      %s38 = sor.u32 %s36, %s37
      %p39 = scmp.eq.s32.totalorder %s38, 0
      %s41 = sadd.s32 %s40, 1
      %s42 = scalar_select %p39, %s40, %s41
      %p45 = pneg %p39
      %p46 = scmp.eq.s32.totalorder %s16, 3
      %p47 = por %p45, %p46
      %p48 = scmp.ne.s32.totalorder %s40, %s43
      %p49 = scmp.eq.s32.totalorder %s16, 0
      %p50 = por %p48, %p49
      %p51 = scmp.ne.s32.totalorder %s40, %s43
      %p52 = scmp.eq.s32.totalorder %s21, 3
      %p53 = por %p51, %p52
      %p54 = scmp.ne.s32.totalorder %s43, %s44
      %p55 = scmp.eq.s32.totalorder %s21, 0
      %p56 = por %p54, %p55
      %p57 = scmp.ne.s32.totalorder %s43, %s44
      %p58 = scmp.eq.s32.totalorder %s22, 3
      %p59 = por %p57, %p58
      %p61 = scmp.ne.s32.totalorder %s44, %s60
      %p62 = scmp.eq.s32.totalorder %s22, 0
      %p63 = por %p61, %p62
      %s65 = sadd.s32 %s64, 1
      %p68 = scmp.eq.s32.totalorder %s16, 3
      %p69 = scmp.ne.s32.totalorder %s64, %s66
      %p70 = scmp.eq.s32.totalorder %s16, 0
      %p71 = por %p69, %p70
      %p72 = scmp.ne.s32.totalorder %s64, %s66
      %p73 = scmp.eq.s32.totalorder %s21, 3
      %p74 = por %p72, %p73
      %p75 = scmp.ne.s32.totalorder %s66, %s67
      %p76 = scmp.eq.s32.totalorder %s21, 0
      %p77 = por %p75, %p76
      %p78 = scmp.ne.s32.totalorder %s66, %s67
      %p79 = scmp.eq.s32.totalorder %s22, 3
      %p80 = por %p78, %p79
      %p82 = scmp.ne.s32.totalorder %s67, %s81
      %p83 = scmp.eq.s32.totalorder %s22, 0
      %p84 = por %p82, %p83
      %s86 = sadd.s32 %s85, 1
      %p89 = scmp.eq.s32.totalorder %s16, 3
      %p90 = scmp.ne.s32.totalorder %s85, %s87
      %p91 = scmp.eq.s32.totalorder %s16, 0
      %p92 = por %p90, %p91
      %p93 = scmp.ne.s32.totalorder %s85, %s87
      %p94 = scmp.eq.s32.totalorder %s21, 3
      %p95 = por %p93, %p94
      %p96 = scmp.ne.s32.totalorder %s87, %s88
      %p97 = scmp.eq.s32.totalorder %s21, 0
      %p98 = por %p96, %p97
      %p99 = scmp.ne.s32.totalorder %s87, %s88
      %p100 = scmp.eq.s32.totalorder %s22, 3
      %p101 = por %p99, %p100
      %p103 = scmp.ne.s32.totalorder %s88, %s102
      %p104 = scmp.eq.s32.totalorder %s22, 0
      %p105 = por %p103, %p104
      %s106 = ssub.s32 %s23, %s35
      %p107 = scmp.eq.s32.totalorder %s106, 0
      %s109 = sadd.s32 %s108, 1
      %s110 = scalar_select %p107, %s108, %s109
      %p113 = pneg %p107
      %p114 = scmp.eq.s32.totalorder %s16, 3
      %p115 = por %p113, %p114
      %p116 = scmp.ne.s32.totalorder %s108, %s111
      %p117 = scmp.eq.s32.totalorder %s16, 0
      %p118 = por %p116, %p117
      %p119 = scmp.ne.s32.totalorder %s108, %s111
      %p120 = scmp.eq.s32.totalorder %s21, 3
      %p121 = por %p119, %p120
      %p122 = scmp.ne.s32.totalorder %s111, %s112
      %p123 = scmp.eq.s32.totalorder %s21, 0
      %p124 = por %p122, %p123
      %p125 = scmp.ne.s32.totalorder %s111, %s112
      %p126 = scmp.eq.s32.totalorder %s22, 3
      %p127 = por %p125, %p126
      %p129 = scmp.ne.s32.totalorder %s112, %s128
      %p130 = scmp.eq.s32.totalorder %s22, 0
      %p131 = por %p129, %p130
      %s132 = ssub.s32 %s23, %s35
      %s133 = ssub.s32 %s24, %s31
      %s134 = sor.u32 %s132, %s133
      %p135 = scmp.eq.s32.totalorder %s134, 0
      %s137 = sadd.s32 %s136, 1
      %s138 = scalar_select %p135, %s136, %s137
      %p141 = pneg %p135
      %p142 = scmp.eq.s32.totalorder %s16, 3
      %p143 = por %p141, %p142
      %p144 = scmp.ne.s32.totalorder %s136, %s139
      %p145 = scmp.eq.s32.totalorder %s16, 0
      %p146 = por %p144, %p145
      %p147 = scmp.ne.s32.totalorder %s136, %s139
      %p148 = scmp.eq.s32.totalorder %s21, 3
      %p149 = por %p147, %p148
      %p150 = scmp.ne.s32.totalorder %s139, %s140
      %p151 = scmp.eq.s32.totalorder %s21, 0
      %p152 = por %p150, %p151
      %p153 = scmp.ne.s32.totalorder %s139, %s140
      %p154 = scmp.eq.s32.totalorder %s22, 3
      %p155 = por %p153, %p154
      %p157 = scmp.ne.s32.totalorder %s140, %s156
      %p158 = scmp.eq.s32.totalorder %s22, 0
      %p159 = por %p157, %p158
      %s161 = sadd.s32 %s160, 1
      %p164 = scmp.eq.s32.totalorder %s16, 3
      %p165 = scmp.ne.s32.totalorder %s160, %s162
      %p166 = scmp.eq.s32.totalorder %s16, 0
      %p167 = por %p165, %p166
      %p168 = scmp.ne.s32.totalorder %s160, %s162
      %p169 = scmp.eq.s32.totalorder %s21, 3
      %p170 = por %p168, %p169
      %p171 = scmp.ne.s32.totalorder %s162, %s163
      %p172 = scmp.eq.s32.totalorder %s21, 0
      %p173 = por %p171, %p172
      %p174 = scmp.ne.s32.totalorder %s162, %s163
      %p175 = scmp.eq.s32.totalorder %s22, 3
      %p176 = por %p174, %p175
      %p178 = scmp.ne.s32.totalorder %s163, %s177
      %p179 = scmp.eq.s32.totalorder %s22, 0
      %p180 = por %p178, %p179
      %s182 = sadd.s32 %s181, 1
      %p185 = scmp.eq.s32.totalorder %s16, 3
      %p186 = scmp.ne.s32.totalorder %s181, %s183
      %p187 = scmp.eq.s32.totalorder %s16, 0
      %p188 = por %p186, %p187
      %p189 = scmp.ne.s32.totalorder %s181, %s183
      %p190 = scmp.eq.s32.totalorder %s21, 3
      %p191 = por %p189, %p190
      %p192 = scmp.ne.s32.totalorder %s183, %s184
      %p193 = scmp.eq.s32.totalorder %s21, 0
      %p194 = por %p192, %p193
      %p195 = scmp.ne.s32.totalorder %s183, %s184
      %p196 = scmp.eq.s32.totalorder %s22, 3
      %p197 = por %p195, %p196
      %p199 = scmp.ne.s32.totalorder %s184, %s198
      %p200 = scmp.eq.s32.totalorder %s22, 0
      %p201 = por %p199, %p200
      %s202 = ssub.s32 %s23, %s35
      %s203 = ssub.s32 %s24, %s31
      %s204 = sor.u32 %s202, %s203
      %p205 = scmp.eq.s32.totalorder %s204, 0
      %s207 = sadd.s32 %s206, 1
      %s208 = scalar_select %p205, %s206, %s207
      %p211 = pneg %p205
      %p212 = scmp.eq.s32.totalorder %s16, 3
      %p213 = por %p211, %p212
      %p214 = scmp.ne.s32.totalorder %s206, %s209
      %p215 = scmp.eq.s32.totalorder %s16, 0
      %p216 = por %p214, %p215
      %p217 = scmp.ne.s32.totalorder %s206, %s209
      %p218 = scmp.eq.s32.totalorder %s21, 3
      %p219 = por %p217, %p218
      %p220 = scmp.ne.s32.totalorder %s209, %s210
      %p221 = scmp.eq.s32.totalorder %s21, 0
      %p222 = por %p220, %p221
      %p223 = scmp.ne.s32.totalorder %s209, %s210
      %p224 = scmp.eq.s32.totalorder %s22, 3
      %p225 = por %p223, %p224
      %p227 = scmp.ne.s32.totalorder %s210, %s226
      %p228 = scmp.eq.s32.totalorder %s22, 0
      %p229 = por %p227, %p228
      %p230 = scmp.le.s32.totalorder 1, %s16
      %p231 = scmp.lt.s32.totalorder %s16, 5
      %p232 = pnand %p230, %p231
      %p233 = pneg %p232
      // Predicated region
      $region9: #{contextnet_block_forward.11} parent=5 // pred_check
        _
      $region10: #{contextnet_block_forward.11} parent=5 // pred_check_branch
        %235 = sbr.rel (%p232) target = $region12
      $region11: #{contextnet_block_forward.11} parent=5 // pred_region
        %s236 = ssub.s32 %s16, 1
        // Predicated region
        $region13: #{contextnet_block_forward.11} parent=11 // pred_check
          %p237 = pneg %p77
        $region14: #{contextnet_block_forward.11} parent=11 // pred_check_branch
          %239 = sbr.rel (%p237) target = $region16
        $region15: #{contextnet_block_forward.11} parent=11 // pred_region
          _
        $region16: #{contextnet_block_forward.11} parent=11 // pred_fallthru
          _
        // Predicated region
        $region17: #{contextnet_block_forward.11} parent=11 // pred_check
          %p240 = pneg %p98
        $region18: #{contextnet_block_forward.11} parent=11 // pred_check_branch
          %242 = sbr.rel (%p240) target = $region20
        $region19: #{contextnet_block_forward.11} parent=11 // pred_region
          _
        $region20: #{contextnet_block_forward.11} parent=11 // pred_fallthru
          _
        // Predicated region
        $region21: #{contextnet_block_forward.11} parent=11 // pred_check
          %p243 = pneg %p173
        $region22: #{contextnet_block_forward.11} parent=11 // pred_check_branch
          %245 = sbr.rel (%p243) target = $region24
        $region23: #{contextnet_block_forward.11} parent=11 // pred_region
          _
        $region24: #{contextnet_block_forward.11} parent=11 // pred_fallthru
          _
        // Predicated region
        $region25: #{contextnet_block_forward.11} parent=11 // pred_check
          %p246 = pneg %p194
        $region26: #{contextnet_block_forward.11} parent=11 // pred_check_branch
          %248 = sbr.rel (%p246) target = $region28
        $region27: #{contextnet_block_forward.11} parent=11 // pred_region
          _
        $region28: #{contextnet_block_forward.11} parent=11 // pred_fallthru
          _
      $region12: #{contextnet_block_forward.11} parent=5 // pred_fallthru
        _
      %p249 = scmp.lt.s32.totalorder %s16, 4
      // Predicated region
      $region29: #{contextnet_block_forward.11} parent=5 // pred_check
        %p250 = pneg %p249
      $region30: #{contextnet_block_forward.11} parent=5 // pred_check_branch
        %252 = sbr.rel (%p250) target = $region32
      $region31: #{contextnet_block_forward.11} parent=5 // pred_region
        // Predicated region
        $region33: #{contextnet_block_forward.11} parent=31 // pred_check
          %p253 = pneg %p50
        $region34: #{contextnet_block_forward.11} parent=31 // pred_check_branch
          %255 = sbr.rel (%p253) target = $region36
        $region35: #{contextnet_block_forward.11} parent=31 // pred_region
          %p256 = scmp.lt.s32.totalorder %s23, 1
          %s257 = scalar_select %p256, %s23, 1
          %p258 = scmp.lt.s32.totalorder %s24, 1
          %s259 = scalar_select %p258, %s24, 1
          %s260 = smul.addr %s257, 2
          %s261 = sadd.s32 %s259, %s260
          %s262 = smul.addr %s261, 8
          %s263 = scalar_lea.vmem %s0, %s262
        $region36: #{contextnet_block_forward.11} parent=31 // pred_fallthru
          _
        // Predicated region
        $region37: #{contextnet_block_forward.11} parent=31 // pred_check
          %p264 = pneg %p118
        $region38: #{contextnet_block_forward.11} parent=31 // pred_check_branch
          %266 = sbr.rel (%p264) target = $region40
        $region39: #{contextnet_block_forward.11} parent=31 // pred_region
          %p267 = scmp.lt.s32.totalorder %s23, 1
          %s268 = scalar_select %p267, %s23, 1
          %s269 = scalar_lea.vmem %s3, %s268
        $region40: #{contextnet_block_forward.11} parent=31 // pred_fallthru
          _
        // Predicated region
        $region41: #{contextnet_block_forward.11} parent=31 // pred_check
          %p270 = pneg %p146
        $region42: #{contextnet_block_forward.11} parent=31 // pred_check_branch
          %272 = sbr.rel (%p270) target = $region44
        $region43: #{contextnet_block_forward.11} parent=31 // pred_region
          %p273 = scmp.lt.s32.totalorder %s23, 1
          %s274 = scalar_select %p273, %s23, 1
          %p275 = scmp.lt.s32.totalorder %s24, 1
          %s276 = scalar_select %p275, %s24, 1
          %s277 = smul.addr %s274, 2
          %s278 = sadd.s32 %s276, %s277
          %s279 = smul.addr %s278, 8
          %s280 = scalar_lea.vmem %s4, %s279
        $region44: #{contextnet_block_forward.11} parent=31 // pred_fallthru
          _
      $region32: #{contextnet_block_forward.11} parent=5 // pred_fallthru
        _
      %p281 = scmp.le.s32.totalorder 1, %s16
      %p282 = scmp.lt.s32.totalorder %s16, 5
      %p283 = pnand %p281, %p282
      %p284 = pneg %p283
      // Predicated region
      $region45: #{contextnet_block_forward.11} parent=5 // pred_check
        _
      $region46: #{contextnet_block_forward.11} parent=5 // pred_check_branch
        %286 = sbr.rel (%p283) target = $region48
      $region47: #{contextnet_block_forward.11} parent=5 // pred_region
        %s287 = ssub.s32 %s16, 1
        %p288 = scmp.lt.s32.totalorder %s25, 1
        %s289 = scalar_select %p288, %s25, 1
        %p290 = scmp.lt.s32.totalorder %s26, 1
        %s291 = scalar_select %p290, %s26, 1
        %s292 = smul.addr %s289, 2
        %s293 = sadd.s32 %s291, %s292
        %s294 = smul.addr %s293, 8
        %s295 = scalar_lea.vmem %s0, %s294
        %p296 = pneg %p56
        %p297 = pneg %p53
        %p298 = pneg %p77
        %p299 = pneg %p74
        %p300 = pneg %p98
        %p301 = pneg %p95
        %p302 = scmp.lt.s32.totalorder %s25, 1
        %s303 = scalar_select %p302, %s25, 1
        %s304 = scalar_lea.vmem %s3, %s303
        %p305 = pneg %p124
        %p306 = pneg %p121
        %p307 = scmp.lt.s32.totalorder %s25, 1
        %s308 = scalar_select %p307, %s25, 1
        %p309 = scmp.lt.s32.totalorder %s26, 1
        %s310 = scalar_select %p309, %s26, 1
        %s311 = smul.addr %s308, 2
        %s312 = sadd.s32 %s310, %s311
        %s313 = smul.addr %s312, 8
        %s314 = scalar_lea.vmem %s4, %s313
        %p315 = pneg %p152
        %p316 = pneg %p149
        %p317 = pneg %p173
        %p318 = pneg %p170
        %p319 = pneg %p194
        %p320 = pneg %p191
        %p321 = pneg %p222
        %p322 = pneg %p219
        %s323 = sand.u32 %s209, 1
        %s324 = scalar_lea.sflag [#allocation3], %s323
        %s325 = sand.u32 %s209, 1
        %s326 = smul.addr %s325, 8
        %s327 = scalar_lea.vmem [#allocation2], %s326
        %p328 = scmp.lt.s32.totalorder %s25, 1
        %s329 = scalar_select %p328, %s25, 1
        %p330 = scmp.lt.s32.totalorder %s26, 1
        %s331 = scalar_select %p330, %s26, 1
        %s332 = smul.addr %s329, 2
        %s333 = sadd.s32 %s331, %s332
        %s334 = smul.addr %s333, 8
        %s335 = scalar_lea.vmem %s0, %s334
        %p336 = scmp.lt.s32.totalorder %s25, 1
        %s337 = scalar_select %p336, %s25, 1
        %s338 = scalar_lea.vmem %s3, %s337
        %p339 = scmp.lt.s32.totalorder %s25, 1
        %s340 = scalar_select %p339, %s25, 1
        %p341 = scmp.lt.s32.totalorder %s26, 1
        %s342 = scalar_select %p341, %s26, 1
        %s343 = smul.addr %s340, 2
        %s344 = sadd.s32 %s342, %s343
        %s345 = smul.addr %s344, 8
        %s346 = scalar_lea.vmem %s4, %s345
        %v347 = vld [vmem:[%s335] sm:$0xff]
        %v348 = vld [vmem:[%s1] sm:$0x1]
        %v350 = vlaneseq
        %v351 = vshrl.u32 %v350, 7
        %v352 = vsub.s32 0, %v351
        %v353 = vrot.slane %v348, %v352
        %v355 = vmul.f32 %v347, %v353
        %v356 = vld [vmem:[%s2] sm:$0x1]
        %v358 = vlaneseq
        %v359 = vshrl.u32 %v358, 7
        %v360 = vsub.s32 0, %v359
        %v361 = vrot.slane %v356, %v360
        %v363 = vadd.f32 %v355, %v361
        %v364 = vsub.f32 0.0, %v363
        %v365 = vmul.f32 %v364, 1.442695
        %v366 = vpow.pop %v365
        %v367 = vadd.f32 %v366, 1.0
        %v368 = vrcp.pop %v367
        %v369 = vmul.f32 1.0, %v368
        %v370 = vmul.f32 %v363, %v369
        %v371 = vld [vmem:[%s346] sm:$0xff]
        %v372 = vld [vmem:[%s5] sm:$0x1]
        %v374 = vlaneseq
        %v375 = vshrl.u32 %v374, 7
        %v376 = vsub.s32 0, %v375
        %v377 = vrot.slane %v372, %v376
        %v379 = vmul.f32 %v371, %v377
        %v380 = vld [vmem:[%s6] sm:$0x1]
        %v382 = vlaneseq
        %v383 = vshrl.u32 %v382, 7
        %v384 = vsub.s32 0, %v383
        %v385 = vrot.slane %v380, %v384
        %v387 = vadd.f32 %v379, %v385
        %v388 = vld [vmem:[%s338] sm:$0x1]
        %v390 = vlaneseq
        %v391 = vshrl.u32 %v390, 7
        %v392 = vsub.s32 0, %v391
        %v393 = vrot.slane %v388, %v392
        %v395 = vmul.f32 %v370, %v393
        %v396 = vadd.f32 %v395, %v387
        %v397 = vsub.f32 0.0, %v396
        %v398 = vmul.f32 %v397, 1.442695
        %v399 = vpow.pop %v398
        %v400 = vadd.f32 %v399, 1.0
        %v401 = vrcp.pop %v400
        %v402 = vmul.f32 1.0, %v401
        %v403 = vmul.f32 %v396, %v402
        %vm404 = vcmask 130048
        %405 = vst.msk [vmem:[%s327] sm:$0xff] %vm404, %v403
        %s406 = sand.u32 %s209, 1
        %s407 = scalar_lea.sflag [#allocation3], %s406
        %s408 = sand.u32 %s209, 1
        %s409 = smul.addr %s408, 8
        %s410 = scalar_lea.vmem [#allocation2], %s409
        // Predicated region
        $region49: #{contextnet_block_forward.11} parent=47 // pred_check
          %p411 = pneg %p219
        $region50: #{contextnet_block_forward.11} parent=47 // pred_check_branch
          %413 = sbr.rel (%p411) target = $region52
        $region51: #{contextnet_block_forward.11} parent=47 // pred_region
          %s415 = ssub.s32 128, 128
          %416 = vsyncadd %s407, %s415
          %s417 = smul.addr %s25, 2
          %s418 = sadd.s32 %s26, %s417
          %s419 = smul.addr %s418, 128
          %s420 = scalar_lea.hbm %s7, %s419
          %s422 = sshll.u32 %s410, 4
          %s423 = int_to_ptr.vmem [resolvable:$true] %s422
          %425 = dma.vmem_to_hbm [thread:$0]  %s423, 128, %s420, %s407
        $region52: #{contextnet_block_forward.11} parent=47 // pred_fallthru
          _
      $region48: #{contextnet_block_forward.11} parent=5 // pred_fallthru
        _
      %p426 = scmp.le.s32.totalorder 2, %s16
      // Predicated region
      $region53: #{contextnet_block_forward.11} parent=5 // pred_check
        %p427 = pneg %p426
      $region54: #{contextnet_block_forward.11} parent=5 // pred_check_branch
        %429 = sbr.rel (%p427) target = $region56
      $region55: #{contextnet_block_forward.11} parent=5 // pred_region
        %s430 = ssub.s32 %s16, 2
        // Predicated region
        $region57: #{contextnet_block_forward.11} parent=55 // pred_check
          %p431 = pneg %p225
        $region58: #{contextnet_block_forward.11} parent=55 // pred_check_branch
          %433 = sbr.rel (%p431) target = $region60
        $region59: #{contextnet_block_forward.11} parent=55 // pred_region
          %s434 = sand.u32 %s210, 1
          %s435 = scalar_lea.sflag [#allocation3], %s434
          %s436 = sand.u32 %s210, 1
          %s437 = smul.addr %s436, 8
          %s438 = scalar_lea.vmem [#allocation2], %s437
          %439 = dma.done %s435, 128
        $region60: #{contextnet_block_forward.11} parent=55 // pred_fallthru
          _
      $region56: #{contextnet_block_forward.11} parent=5 // pred_fallthru
        _
    $region6: #{contextnet_block_forward.11} parent=1 // loop_footer
      %s20 = sadd.s32 1, %s16
    $region7: #{contextnet_block_forward.11} parent=1 // loop_footer_branch
      %15 = sbr.rel target = $region3
    $region8: #{contextnet_block_forward.11} parent=1 // loop_exit
      _
    %440 = vsyncpa [#allocation3], 1
    %s441 = scalar_lea.sflag [#allocation3], 1
    %442 = vsyncpa %s441, 1

// kernel: contextnet_block_forward.7
$region0: #{contextnet_block_forward.7}
  #allocation0 [shape = 'u32[]', space=smem, size = 0x4, offset = 0x4, fixed_abs, tag = 'smem constant byte address 0x4 - core index']
  #allocation1 [shape = 'u32[144,128]{1,0:T(1,128)}', space=vmem, size = 0x12000, scoped, tag = 'internal scratch']
  %s0 = inlined_call_operand.vmem [shape: f32[2,24,16], index: 0, kind: input, shape index: {}]
  %s1 = inlined_call_operand.vmem [shape: f32[1,16], index: 1, kind: input, shape index: {}]
  %s2 = inlined_call_operand.vmem [shape: f32[1,16], index: 2, kind: input, shape index: {}]
  %s3 = inlined_call_operand.vmem [shape: f32[3,16,16], index: 3, kind: input, shape index: {}]
  %s4 = inlined_call_operand.vmem [shape: f32[1,16], index: 4, kind: input, shape index: {}]
  %s5 = inlined_call_operand.vmem [shape: f32[2,16,16], index: 5, kind: output, shape index: {0}]
  %s6 = inlined_call_operand.vmem [shape: f32[2,2,2,16], index: 6, kind: output, shape index: {1}]
  %7 = xla_tuple %s5, %s6
  %s8 = sld [smem:[#allocation0]]
  $region61: #{contextnet_block_forward.7} parent=0
    _
  %s10 = ssub.s32 1, %s8
  %s11 = scalar_select 0, %s10, %s8
  loop: start=0, step=1, limit=6
  $region2: #{contextnet_block_forward.7} parent=0 // loop_pre_header
    _
  $region3: #{contextnet_block_forward.7} parent=0 // loop_header
    %s13 = sphi 0, %s17
    %p14 = scmp.ge.s32.totalorder %s13, 6
    %s20 = sphi 0, %s32
    %s21 = sphi 0, %s28
    %s22 = sphi 0, %s20
    %s23 = sphi 0, %s21
    %s24 = sphi 0, %s22
    %s25 = sphi 0, %s23
    %s35 = sphi 0, %s37
    %s38 = sphi 0, %s35
    %s39 = sphi 0, %s38
    %s55 = sphi 0, %s39
    %s59 = sphi 0, %s59
    %s61 = sphi 0, %s59
    %s62 = sphi 0, %s61
    %s76 = sphi 0, %s62
    %s80 = sphi 0, %s80
    %s82 = sphi 0, %s80
    %s83 = sphi 0, %s82
    %s97 = sphi 0, %s83
    %s101 = sphi 0, %s101
    %s103 = sphi 0, %s101
    %s104 = sphi 0, %s103
    %s118 = sphi 0, %s104
    %s122 = sphi 0, %s122
    %s124 = sphi 0, %s122
    %s125 = sphi 0, %s124
    %s139 = sphi 0, %s125
    %s147 = sphi 0, %s149
    %s150 = sphi 0, %s147
    %s151 = sphi 0, %s150
    %s167 = sphi 0, %s151
    %s175 = sphi 0, %s177
    %s178 = sphi 0, %s175
    %s179 = sphi 0, %s178
    %s195 = sphi 0, %s179
  $region4: #{contextnet_block_forward.7} parent=0 // loop_header_branch
    %16 = sbr.rel (%p14) target = $region8
  $region5: #{contextnet_block_forward.7} parent=0 // loop_body
    %s18 = ssub.s32 %s13, 1
    %s19 = ssub.s32 %s13, 2
    %s26 = sadd.s32 1, %s21
    %p27 = scmp.ge.s32.totalorder %s26, 2
    %s28 = scalar_select %p27, 0, %s26
    %s29 = sadd.s32 1, %s20
    %s30 = scalar_select %p27, %s29, %s20
    %p31 = scmp.ge.s32.totalorder %s30, 2
    %s32 = scalar_select %p31, 0, %s30
    %s33 = ssub.s32 %s20, %s32
    %p34 = scmp.eq.s32.totalorder %s33, 0
    %s36 = sadd.s32 %s35, 1
    %s37 = scalar_select %p34, %s35, %s36
    %p40 = pneg %p34
    %p41 = scmp.eq.s32.totalorder %s13, 3
    %p42 = por %p40, %p41
    %p43 = scmp.ne.s32.totalorder %s35, %s38
    %p44 = scmp.eq.s32.totalorder %s13, 0
    %p45 = por %p43, %p44
    %p46 = scmp.ne.s32.totalorder %s35, %s38
    %p47 = scmp.eq.s32.totalorder %s18, 3
    %p48 = por %p46, %p47
    %p49 = scmp.ne.s32.totalorder %s38, %s39
    %p50 = scmp.eq.s32.totalorder %s18, 0
    %p51 = por %p49, %p50
    %p52 = scmp.ne.s32.totalorder %s38, %s39
    %p53 = scmp.eq.s32.totalorder %s19, 3
    %p54 = por %p52, %p53
    %p56 = scmp.ne.s32.totalorder %s39, %s55
    %p57 = scmp.eq.s32.totalorder %s19, 0
    %p58 = por %p56, %p57
    %s60 = sadd.s32 %s59, 1
    %p63 = scmp.eq.s32.totalorder %s13, 3
    %p64 = scmp.ne.s32.totalorder %s59, %s61
    %p65 = scmp.eq.s32.totalorder %s13, 0
    %p66 = por %p64, %p65
    %p67 = scmp.ne.s32.totalorder %s59, %s61
    %p68 = scmp.eq.s32.totalorder %s18, 3
    %p69 = por %p67, %p68
    %p70 = scmp.ne.s32.totalorder %s61, %s62
    %p71 = scmp.eq.s32.totalorder %s18, 0
    %p72 = por %p70, %p71
    %p73 = scmp.ne.s32.totalorder %s61, %s62
    %p74 = scmp.eq.s32.totalorder %s19, 3
    %p75 = por %p73, %p74
    %p77 = scmp.ne.s32.totalorder %s62, %s76
    %p78 = scmp.eq.s32.totalorder %s19, 0
    %p79 = por %p77, %p78
    %s81 = sadd.s32 %s80, 1
    %p84 = scmp.eq.s32.totalorder %s13, 3
    %p85 = scmp.ne.s32.totalorder %s80, %s82
    %p86 = scmp.eq.s32.totalorder %s13, 0
    %p87 = por %p85, %p86
    %p88 = scmp.ne.s32.totalorder %s80, %s82
    %p89 = scmp.eq.s32.totalorder %s18, 3
    %p90 = por %p88, %p89
    %p91 = scmp.ne.s32.totalorder %s82, %s83
    %p92 = scmp.eq.s32.totalorder %s18, 0
    %p93 = por %p91, %p92
    %p94 = scmp.ne.s32.totalorder %s82, %s83
    %p95 = scmp.eq.s32.totalorder %s19, 3
    %p96 = por %p94, %p95
    %p98 = scmp.ne.s32.totalorder %s83, %s97
    %p99 = scmp.eq.s32.totalorder %s19, 0
    %p100 = por %p98, %p99
    %s102 = sadd.s32 %s101, 1
    %p105 = scmp.eq.s32.totalorder %s13, 3
    %p106 = scmp.ne.s32.totalorder %s101, %s103
    %p107 = scmp.eq.s32.totalorder %s13, 0
    %p108 = por %p106, %p107
    %p109 = scmp.ne.s32.totalorder %s101, %s103
    %p110 = scmp.eq.s32.totalorder %s18, 3
    %p111 = por %p109, %p110
    %p112 = scmp.ne.s32.totalorder %s103, %s104
    %p113 = scmp.eq.s32.totalorder %s18, 0
    %p114 = por %p112, %p113
    %p115 = scmp.ne.s32.totalorder %s103, %s104
    %p116 = scmp.eq.s32.totalorder %s19, 3
    %p117 = por %p115, %p116
    %p119 = scmp.ne.s32.totalorder %s104, %s118
    %p120 = scmp.eq.s32.totalorder %s19, 0
    %p121 = por %p119, %p120
    %s123 = sadd.s32 %s122, 1
    %p126 = scmp.eq.s32.totalorder %s13, 3
    %p127 = scmp.ne.s32.totalorder %s122, %s124
    %p128 = scmp.eq.s32.totalorder %s13, 0
    %p129 = por %p127, %p128
    %p130 = scmp.ne.s32.totalorder %s122, %s124
    %p131 = scmp.eq.s32.totalorder %s18, 3
    %p132 = por %p130, %p131
    %p133 = scmp.ne.s32.totalorder %s124, %s125
    %p134 = scmp.eq.s32.totalorder %s18, 0
    %p135 = por %p133, %p134
    %p136 = scmp.ne.s32.totalorder %s124, %s125
    %p137 = scmp.eq.s32.totalorder %s19, 3
    %p138 = por %p136, %p137
    %p140 = scmp.ne.s32.totalorder %s125, %s139
    %p141 = scmp.eq.s32.totalorder %s19, 0
    %p142 = por %p140, %p141
    %s143 = ssub.s32 %s20, %s32
    %s144 = ssub.s32 %s21, %s28
    %s145 = sor.u32 %s143, %s144
    %p146 = scmp.eq.s32.totalorder %s145, 0
    %s148 = sadd.s32 %s147, 1
    %s149 = scalar_select %p146, %s147, %s148
    %p152 = pneg %p146
    %p153 = scmp.eq.s32.totalorder %s13, 3
    %p154 = por %p152, %p153
    %p155 = scmp.ne.s32.totalorder %s147, %s150
    %p156 = scmp.eq.s32.totalorder %s13, 0
    %p157 = por %p155, %p156
    %p158 = scmp.ne.s32.totalorder %s147, %s150
    %p159 = scmp.eq.s32.totalorder %s18, 3
    %p160 = por %p158, %p159
    %p161 = scmp.ne.s32.totalorder %s150, %s151
    %p162 = scmp.eq.s32.totalorder %s18, 0
    %p163 = por %p161, %p162
    %p164 = scmp.ne.s32.totalorder %s150, %s151
    %p165 = scmp.eq.s32.totalorder %s19, 3
    %p166 = por %p164, %p165
    %p168 = scmp.ne.s32.totalorder %s151, %s167
    %p169 = scmp.eq.s32.totalorder %s19, 0
    %p170 = por %p168, %p169
    %s171 = ssub.s32 %s20, %s32
    %s172 = ssub.s32 %s21, %s28
    %s173 = sor.u32 %s171, %s172
    %p174 = scmp.eq.s32.totalorder %s173, 0
    %s176 = sadd.s32 %s175, 1
    %s177 = scalar_select %p174, %s175, %s176
    %p180 = pneg %p174
    %p181 = scmp.eq.s32.totalorder %s13, 3
    %p182 = por %p180, %p181
    %p183 = scmp.ne.s32.totalorder %s175, %s178
    %p184 = scmp.eq.s32.totalorder %s13, 0
    %p185 = por %p183, %p184
    %p186 = scmp.ne.s32.totalorder %s175, %s178
    %p187 = scmp.eq.s32.totalorder %s18, 3
    %p188 = por %p186, %p187
    %p189 = scmp.ne.s32.totalorder %s178, %s179
    %p190 = scmp.eq.s32.totalorder %s18, 0
    %p191 = por %p189, %p190
    %p192 = scmp.ne.s32.totalorder %s178, %s179
    %p193 = scmp.eq.s32.totalorder %s19, 3
    %p194 = por %p192, %p193
    %p196 = scmp.ne.s32.totalorder %s179, %s195
    %p197 = scmp.eq.s32.totalorder %s19, 0
    %p198 = por %p196, %p197
    %p199 = scmp.le.s32.totalorder 1, %s13
    %p200 = scmp.lt.s32.totalorder %s13, 5
    %p201 = pnand %p199, %p200
    %p202 = pneg %p201
    // Predicated region
    $region9: #{contextnet_block_forward.7} parent=5 // pred_check
      _
    $region10: #{contextnet_block_forward.7} parent=5 // pred_check_branch
      %204 = sbr.rel (%p201) target = $region12
    $region11: #{contextnet_block_forward.7} parent=5 // pred_region
      %s205 = ssub.s32 %s13, 1
      // Predicated region
      $region13: #{contextnet_block_forward.7} parent=11 // pred_check
        %p206 = pneg %p72
      $region14: #{contextnet_block_forward.7} parent=11 // pred_check_branch
        %208 = sbr.rel (%p206) target = $region16
      $region15: #{contextnet_block_forward.7} parent=11 // pred_region
        _
      $region16: #{contextnet_block_forward.7} parent=11 // pred_fallthru
        _
      // Predicated region
      $region17: #{contextnet_block_forward.7} parent=11 // pred_check
        %p209 = pneg %p93
      $region18: #{contextnet_block_forward.7} parent=11 // pred_check_branch
        %211 = sbr.rel (%p209) target = $region20
      $region19: #{contextnet_block_forward.7} parent=11 // pred_region
        _
      $region20: #{contextnet_block_forward.7} parent=11 // pred_fallthru
        _
      // Predicated region
      $region21: #{contextnet_block_forward.7} parent=11 // pred_check
        %p212 = pneg %p114
      $region22: #{contextnet_block_forward.7} parent=11 // pred_check_branch
        %214 = sbr.rel (%p212) target = $region24
      $region23: #{contextnet_block_forward.7} parent=11 // pred_region
        _
      $region24: #{contextnet_block_forward.7} parent=11 // pred_fallthru
        _
      // Predicated region
      $region25: #{contextnet_block_forward.7} parent=11 // pred_check
        %p215 = pneg %p135
      $region26: #{contextnet_block_forward.7} parent=11 // pred_check_branch
        %217 = sbr.rel (%p215) target = $region28
      $region27: #{contextnet_block_forward.7} parent=11 // pred_region
        _
      $region28: #{contextnet_block_forward.7} parent=11 // pred_fallthru
        _
    $region12: #{contextnet_block_forward.7} parent=5 // pred_fallthru
      _
    %p218 = scmp.lt.s32.totalorder %s13, 4
    // Predicated region
    $region29: #{contextnet_block_forward.7} parent=5 // pred_check
      %p219 = pneg %p218
    $region30: #{contextnet_block_forward.7} parent=5 // pred_check_branch
      %221 = sbr.rel (%p219) target = $region32
    $region31: #{contextnet_block_forward.7} parent=5 // pred_region
      // Predicated region
      $region33: #{contextnet_block_forward.7} parent=31 // pred_check
        %p222 = pneg %p45
      $region34: #{contextnet_block_forward.7} parent=31 // pred_check_branch
        %224 = sbr.rel (%p222) target = $region36
      $region35: #{contextnet_block_forward.7} parent=31 // pred_region
        %p225 = scmp.lt.s32.totalorder %s20, 1
        %s226 = scalar_select %p225, %s20, 1
        %s227 = smul.addr %s226, 3
        %s228 = smul.addr %s227, 8
        %s229 = scalar_lea.vmem %s0, %s228
      $region36: #{contextnet_block_forward.7} parent=31 // pred_fallthru
        _
    $region32: #{contextnet_block_forward.7} parent=5 // pred_fallthru
      _
    %p230 = scmp.le.s32.totalorder 1, %s13
    %p231 = scmp.lt.s32.totalorder %s13, 5
    %p232 = pnand %p230, %p231
    %p233 = pneg %p232
    // Predicated region
    $region37: #{contextnet_block_forward.7} parent=5 // pred_check
      _
    $region38: #{contextnet_block_forward.7} parent=5 // pred_check_branch
      %235 = sbr.rel (%p232) target = $region40
    $region39: #{contextnet_block_forward.7} parent=5 // pred_region
      %s236 = ssub.s32 %s13, 1
      %p237 = scmp.lt.s32.totalorder %s22, 1
      %s238 = scalar_select %p237, %s22, 1
      %s239 = smul.addr %s238, 3
      %s240 = smul.addr %s239, 8
      %s241 = scalar_lea.vmem %s0, %s240
      %p242 = pneg %p51
      %p243 = pneg %p48
      %p244 = pneg %p72
      %p245 = pneg %p69
      %p246 = pneg %p93
      %p247 = pneg %p90
      %p248 = pneg %p114
      %p249 = pneg %p111
      %p250 = pneg %p135
      %p251 = pneg %p132
      %p252 = pneg %p163
      %p253 = pneg %p160
      %p254 = scmp.lt.s32.totalorder %s22, 1
      %s255 = scalar_select %p254, %s22, 1
      %p256 = scmp.lt.s32.totalorder %s23, 1
      %s257 = scalar_select %p256, %s23, 1
      %s258 = smul.addr %s255, 2
      %s259 = sadd.s32 %s257, %s258
      %s260 = smul.addr %s259, 8
      %s261 = scalar_lea.vmem %s5, %s260
      %p262 = pneg %p191
      %p263 = pneg %p188
      %p264 = scmp.lt.s32.totalorder %s22, 1
      %s265 = scalar_select %p264, %s22, 1
      %p266 = scmp.lt.s32.totalorder %s23, 1
      %s267 = scalar_select %p266, %s23, 1
      %s268 = smul.addr %s265, 2
      %s269 = sadd.s32 %s267, %s268
      %s270 = smul.addr %s269, 2
      %s271 = scalar_lea.vmem %s6, %s270
      %p272 = scmp.lt.s32.totalorder %s22, 1
      %s273 = scalar_select %p272, %s22, 1
      %s274 = smul.addr %s273, 3
      %s275 = smul.addr %s274, 8
      %s276 = scalar_lea.vmem %s0, %s275
      %p277 = scmp.lt.s32.totalorder %s22, 1
      %s278 = scalar_select %p277, %s22, 1
      %p279 = scmp.lt.s32.totalorder %s23, 1
      %s280 = scalar_select %p279, %s23, 1
      %s281 = smul.addr %s278, 2
      %s282 = sadd.s32 %s280, %s281
      %s283 = smul.addr %s282, 8
      %s284 = scalar_lea.vmem %s5, %s283
      %p285 = scmp.lt.s32.totalorder %s22, 1
      %s286 = scalar_select %p285, %s22, 1
      %p287 = scmp.lt.s32.totalorder %s23, 1
      %s288 = scalar_select %p287, %s23, 1
      %s289 = smul.addr %s286, 2
      %s290 = sadd.s32 %s288, %s289
      %s291 = smul.addr %s290, 2
      %s292 = scalar_lea.vmem %s6, %s291
      %s293 = smul.u32 %s23, 8
      %s294 = scalar_lea.vmem %s276, %s293
      %v295 = vld [vmem:[%s294] sm:$0xff]
      %v296 = vld [vmem:[%s294 + $0x8] sm:$0xff]
      %v297 = vld [vmem:[%s1] sm:$0x1]
      %v299 = vlaneseq
      %v300 = vshrl.u32 %v299, 7
      %v301 = vsub.s32 0, %v300
      %v302 = vrot.slane %v297, %v301
      %v304 = vmul.f32 %v295, %v302
      %v305 = vmul.f32 %v296, %v302
      %v306 = vld [vmem:[%s2] sm:$0x1]
      %v308 = vlaneseq
      %v309 = vshrl.u32 %v308, 7
      %v310 = vsub.s32 0, %v309
      %v311 = vrot.slane %v306, %v310
      %v313 = vadd.f32 %v304, %v311
      %v314 = vadd.f32 %v305, %v311
      %v315 = vsub.f32 0.0, %v313
      %v316 = vsub.f32 0.0, %v314
      %v317 = vmul.f32 %v315, 1.442695
      %v318 = vpow.pop %v317
      %v319 = vmul.f32 %v316, 1.442695
      %v320 = vpow.pop %v319
      %v321 = vadd.f32 %v318, 1.0
      %v322 = vadd.f32 %v320, 1.0
      %v323 = vrcp.pop %v321
      %v324 = vmul.f32 1.0, %v323
      %v325 = vrcp.pop %v322
      %v326 = vmul.f32 1.0, %v325
      %v327 = vmul.f32 %v313, %v324
      %v328 = vmul.f32 %v314, %v326
      %v329 = vld [vmem:[%s3] sm:$0xff]
      %v330 = vld [vmem:[%s3 + $0x8] sm:$0xff]
      %s331 = scalar_lea.vmem %s3, 16
      %v332 = vld [vmem:[%s331] sm:$0xff]
      %v333 = vld [vmem:[%s331 + $0x8] sm:$0xff]
      %vm336 = vcmask 1046528
      %v337 = vrot.slane %v327, 1
      %v338 = vrot.slane %v328, 1
      %v339 = vsel %vm336, %v337, %v338
      %vm340 = vcmask 130048
      %v341 = vsel %vm340, %v339, 0
      %343 = vmatprep.subr.mxu0 0.0
      %344 = vmatpush1.msra.mxu0 0.0
      %345 = vmatprep.subr.mxu0 0.0
      %346 = vmatpush1.msra.mxu0 0.0
      %347 = vmatprep.subr.mxu0 0.0
      %348 = vmatpush1.msra.mxu0 0.0
      %349 = vmatprep.subr.mxu0 0.0
      %350 = vmatpush1.msra.mxu0 0.0
      %351 = vmatprep.subr.mxu0 0.0
      %352 = vmatpush1.msra.mxu0 0.0
      %353 = vmatprep.subr.mxu0 0.0
      %354 = vmatpush1.msra.mxu0 0.0
      %355 = vmatprep.subr.mxu0 0.0
      %356 = vmatpush1.msra.mxu0 0.0
      %357 = vmatprep.subr.mxu0 0.0
      %358 = vmatpush1.msra.mxu0 0.0
      %359 = vmatprep.subr.mxu0 0.0
      %360 = vmatpush1.msra.mxu0 0.0
      %361 = vmatprep.subr.mxu0 0.0
      %362 = vmatpush1.msra.mxu0 0.0
      %363 = vmatprep.subr.mxu0 0.0
      %364 = vmatpush1.msra.mxu0 0.0
      %365 = vmatprep.subr.mxu0 0.0
      %366 = vmatpush1.msra.mxu0 0.0
      %367 = vmatprep.subr.mxu0 0.0
      %368 = vmatpush1.msra.mxu0 0.0
      %369 = vmatprep.subr.mxu0 0.0
      %370 = vmatpush1.msra.mxu0 0.0
      %371 = vmatprep.subr.mxu0 0.0
      %372 = vmatpush1.msra.mxu0 %v333
      %373 = vmatprep.subr.mxu0 0.0
      %374 = vmatpush1.msra.mxu0 %v332
      %375 = vmatprep.subr.mxu0 0.0
      %376 = vmatpush2.msra.mxu0 0.0
      %377 = vmatprep.subr.mxu0 0.0
      %378 = vmatpush2.msra.mxu0 0.0
      %379 = vmatprep.subr.mxu0 0.0
      %380 = vmatpush2.msra.mxu0 0.0
      %381 = vmatprep.subr.mxu0 0.0
      %382 = vmatpush2.msra.mxu0 0.0
      %383 = vmatprep.subr.mxu0 0.0
      %384 = vmatpush2.msra.mxu0 0.0
      %385 = vmatprep.subr.mxu0 0.0
      %386 = vmatpush2.msra.mxu0 0.0
      %387 = vmatprep.subr.mxu0 0.0
      %388 = vmatpush2.msra.mxu0 0.0
      %389 = vmatprep.subr.mxu0 0.0
      %390 = vmatpush2.msra.mxu0 0.0
      %391 = vmatprep.subr.mxu0 0.0
      %392 = vmatpush2.msra.mxu0 0.0
      %393 = vmatprep.subr.mxu0 0.0
      %394 = vmatpush2.msra.mxu0 0.0
      %395 = vmatprep.subr.mxu0 0.0
      %396 = vmatpush2.msra.mxu0 0.0
      %397 = vmatprep.subr.mxu0 0.0
      %398 = vmatpush2.msra.mxu0 0.0
      %399 = vmatprep.subr.mxu0 0.0
      %400 = vmatpush2.msra.mxu0 0.0
      %401 = vmatprep.subr.mxu0 0.0
      %402 = vmatpush2.msra.mxu0 0.0
      %403 = vmatprep.subr.mxu0 0.0
      %404 = vmatpush2.msra.mxu0 0.0
      %405 = vmatprep.subr.mxu0 0.0
      %406 = vmatpush2.msra.mxu0 0.0
      %407 = vmatprep.mubr.f32.mxu0 0.0
      %408 = vmatmul.mubr.f32.gmra.mxu0 %v341
      %v409 = vpop.f32.mrf.mxu0
      %v410 = vadd.f32 0.0, %v409
      %v411 = vpop.f32.mrf.mxu0
      %412 = vdwg.mxu0
      %v413 = vsel %vm340, %v327, 0
      %415 = vmatprep.subr.mxu0 0.0
      %416 = vmatpush1.msra.mxu0 0.0
      %417 = vmatprep.subr.mxu0 0.0
      %418 = vmatpush1.msra.mxu0 0.0
      %419 = vmatprep.subr.mxu0 0.0
      %420 = vmatpush1.msra.mxu0 0.0
      %421 = vmatprep.subr.mxu0 0.0
      %422 = vmatpush1.msra.mxu0 0.0
      %423 = vmatprep.subr.mxu0 0.0
      %424 = vmatpush1.msra.mxu0 0.0
      %425 = vmatprep.subr.mxu0 0.0
      %426 = vmatpush1.msra.mxu0 0.0
      %427 = vmatprep.subr.mxu0 0.0
      %428 = vmatpush1.msra.mxu0 0.0
      %429 = vmatprep.subr.mxu0 0.0
      %430 = vmatpush1.msra.mxu0 0.0
      %431 = vmatprep.subr.mxu0 0.0
      %432 = vmatpush1.msra.mxu0 0.0
      %433 = vmatprep.subr.mxu0 0.0
      %434 = vmatpush1.msra.mxu0 0.0
      %435 = vmatprep.subr.mxu0 0.0
      %436 = vmatpush1.msra.mxu0 0.0
      %437 = vmatprep.subr.mxu0 0.0
      %438 = vmatpush1.msra.mxu0 0.0
      %439 = vmatprep.subr.mxu0 0.0
      %440 = vmatpush1.msra.mxu0 0.0
      %441 = vmatprep.subr.mxu0 0.0
      %442 = vmatpush1.msra.mxu0 0.0
      %443 = vmatprep.subr.mxu0 0.0
      %444 = vmatpush1.msra.mxu0 %v330
      %445 = vmatprep.subr.mxu0 0.0
      %446 = vmatpush1.msra.mxu0 %v329
      %447 = vmatprep.subr.mxu0 0.0
      %448 = vmatpush2.msra.mxu0 0.0
      %449 = vmatprep.subr.mxu0 0.0
      %450 = vmatpush2.msra.mxu0 0.0
      %451 = vmatprep.subr.mxu0 0.0
      %452 = vmatpush2.msra.mxu0 0.0
      %453 = vmatprep.subr.mxu0 0.0
      %454 = vmatpush2.msra.mxu0 0.0
      %455 = vmatprep.subr.mxu0 0.0
      %456 = vmatpush2.msra.mxu0 0.0
      %457 = vmatprep.subr.mxu0 0.0
      %458 = vmatpush2.msra.mxu0 0.0
      %459 = vmatprep.subr.mxu0 0.0
      %460 = vmatpush2.msra.mxu0 0.0
      %461 = vmatprep.subr.mxu0 0.0
      %462 = vmatpush2.msra.mxu0 0.0
      %463 = vmatprep.subr.mxu0 0.0
      %464 = vmatpush2.msra.mxu0 0.0
      %465 = vmatprep.subr.mxu0 0.0
      %466 = vmatpush2.msra.mxu0 0.0
      %467 = vmatprep.subr.mxu0 0.0
      %468 = vmatpush2.msra.mxu0 0.0
      %469 = vmatprep.subr.mxu0 0.0
      %470 = vmatpush2.msra.mxu0 0.0
      %471 = vmatprep.subr.mxu0 0.0
      %472 = vmatpush2.msra.mxu0 0.0
      %473 = vmatprep.subr.mxu0 0.0
      %474 = vmatpush2.msra.mxu0 0.0
      %475 = vmatprep.subr.mxu0 0.0
      %476 = vmatpush2.msra.mxu0 0.0
      %477 = vmatprep.subr.mxu0 0.0
      %478 = vmatpush2.msra.mxu0 0.0
      %479 = vmatprep.mubr.f32.mxu0 0.0
      %480 = vmatmul.mubr.f32.gmra.mxu0 %v413
      %v481 = vpop.f32.mrf.mxu0
      %v482 = vadd.f32 %v410, %v481
      %v483 = vpop.f32.mrf.mxu0
      %484 = vdwg.mxu0
      %s485 = scalar_lea.vmem %s3, 32
      %v486 = vld [vmem:[%s485] sm:$0xff]
      %v487 = vld [vmem:[%s485 + $0x8] sm:$0xff]
      %vm488 = vcmask 1045504
      %v489 = vrot.slane %v327, 2
      %v490 = vrot.slane %v328, 2
      %v491 = vsel %vm488, %v489, %v490
      %v492 = vsel %vm340, %v491, 0
      %494 = vmatprep.subr.mxu0 0.0
      %495 = vmatpush1.msra.mxu0 0.0
      %496 = vmatprep.subr.mxu0 0.0
      %497 = vmatpush1.msra.mxu0 0.0
      %498 = vmatprep.subr.mxu0 0.0
      %499 = vmatpush1.msra.mxu0 0.0
      %500 = vmatprep.subr.mxu0 0.0
      %501 = vmatpush1.msra.mxu0 0.0
      %502 = vmatprep.subr.mxu0 0.0
      %503 = vmatpush1.msra.mxu0 0.0
      %504 = vmatprep.subr.mxu0 0.0
      %505 = vmatpush1.msra.mxu0 0.0
      %506 = vmatprep.subr.mxu0 0.0
      %507 = vmatpush1.msra.mxu0 0.0
      %508 = vmatprep.subr.mxu0 0.0
      %509 = vmatpush1.msra.mxu0 0.0
      %510 = vmatprep.subr.mxu0 0.0
      %511 = vmatpush1.msra.mxu0 0.0
      %512 = vmatprep.subr.mxu0 0.0
      %513 = vmatpush1.msra.mxu0 0.0
      %514 = vmatprep.subr.mxu0 0.0
      %515 = vmatpush1.msra.mxu0 0.0
      %516 = vmatprep.subr.mxu0 0.0
      %517 = vmatpush1.msra.mxu0 0.0
      %518 = vmatprep.subr.mxu0 0.0
      %519 = vmatpush1.msra.mxu0 0.0
      %520 = vmatprep.subr.mxu0 0.0
      %521 = vmatpush1.msra.mxu0 0.0
      %522 = vmatprep.subr.mxu0 0.0
      %523 = vmatpush1.msra.mxu0 %v487
      %524 = vmatprep.subr.mxu0 0.0
      %525 = vmatpush1.msra.mxu0 %v486
      %526 = vmatprep.subr.mxu0 0.0
      %527 = vmatpush2.msra.mxu0 0.0
      %528 = vmatprep.subr.mxu0 0.0
      %529 = vmatpush2.msra.mxu0 0.0
      %530 = vmatprep.subr.mxu0 0.0
      %531 = vmatpush2.msra.mxu0 0.0
      %532 = vmatprep.subr.mxu0 0.0
      %533 = vmatpush2.msra.mxu0 0.0
      %534 = vmatprep.subr.mxu0 0.0
      %535 = vmatpush2.msra.mxu0 0.0
      %536 = vmatprep.subr.mxu0 0.0
      %537 = vmatpush2.msra.mxu0 0.0
      %538 = vmatprep.subr.mxu0 0.0
      %539 = vmatpush2.msra.mxu0 0.0
      %540 = vmatprep.subr.mxu0 0.0
      %541 = vmatpush2.msra.mxu0 0.0
      %542 = vmatprep.subr.mxu0 0.0
      %543 = vmatpush2.msra.mxu0 0.0
      %544 = vmatprep.subr.mxu0 0.0
      %545 = vmatpush2.msra.mxu0 0.0
      %546 = vmatprep.subr.mxu0 0.0
      %547 = vmatpush2.msra.mxu0 0.0
      %548 = vmatprep.subr.mxu0 0.0
      %549 = vmatpush2.msra.mxu0 0.0
      %550 = vmatprep.subr.mxu0 0.0
      %551 = vmatpush2.msra.mxu0 0.0
      %552 = vmatprep.subr.mxu0 0.0
      %553 = vmatpush2.msra.mxu0 0.0
      %554 = vmatprep.subr.mxu0 0.0
      %555 = vmatpush2.msra.mxu0 0.0
      %556 = vmatprep.subr.mxu0 0.0
      %557 = vmatpush2.msra.mxu0 0.0
      %558 = vmatprep.mubr.f32.mxu0 0.0
      %559 = vmatmul.mubr.f32.gmra.mxu0 %v492
      %v560 = vpop.f32.mrf.mxu0
      %v561 = vadd.f32 0.0, %v560
      %v562 = vpop.f32.mrf.mxu0
      %563 = vdwg.mxu0
      %v564 = vadd.f32 %v482, %v561
      %v565 = vld [vmem:[%s4] sm:$0x1]
      %v567 = vlaneseq
      %v568 = vshrl.u32 %v567, 7
      %v569 = vsub.s32 0, %v568
      %v570 = vrot.slane %v565, %v569
      %v572 = vadd.f32 %v564, %v570
      %573 = vst.msk [vmem:[%s284] sm:$0xff] %vm340, %v572
      %v574 = vsel %vm340, %v572, 0.0
      %v575 = vrot.slane %v574, 4
      %v576 = vadd.f32 %v574, %v575
      %v577 = vrot.slane %v576, 2
      %v578 = vadd.f32 %v576, %v577
      %v579 = vrot.slane %v578, 1
      %v580 = vadd.f32 %v578, %v579
      %v581 = vmul.f32 %v572, %v572
      %v582 = vsel %vm340, %v581, 0.0
      %v583 = vrot.slane %v582, 4
      %v584 = vadd.f32 %v582, %v583
      %v585 = vrot.slane %v584, 2
      %v586 = vadd.f32 %v584, %v585
      %v587 = vrot.slane %v586, 1
      %v588 = vadd.f32 %v586, %v587
      %vm589 = vcmask 1040384
      %v590 = vsel %vm589, %v580, %v588
      %vm591 = vcmask 123904
      %592 = vst.msk [vmem:[%s292] sm:$0x3] %vm591, %v590
      %p593 = scmp.lt.s32.totalorder %s22, 1
      %s594 = scalar_select %p593, %s22, 1
      %p595 = scmp.lt.s32.totalorder %s23, 1
      %s596 = scalar_select %p595, %s23, 1
      %s597 = smul.addr %s594, 2
      %s598 = sadd.s32 %s596, %s597
      %s599 = smul.addr %s598, 8
      %s600 = scalar_lea.vmem %s5, %s599
      %p601 = scmp.lt.s32.totalorder %s22, 1
      %s602 = scalar_select %p601, %s22, 1
      %p603 = scmp.lt.s32.totalorder %s23, 1
      %s604 = scalar_select %p603, %s23, 1
      %s605 = smul.addr %s602, 2
      %s606 = sadd.s32 %s604, %s605
      %s607 = smul.addr %s606, 2
      %s608 = scalar_lea.vmem %s6, %s607
      // Predicated region
      $region41: #{contextnet_block_forward.7} parent=39 // pred_check
        %p609 = pneg %p160
      $region42: #{contextnet_block_forward.7} parent=39 // pred_check_branch
        %611 = sbr.rel (%p609) target = $region44
      $region43: #{contextnet_block_forward.7} parent=39 // pred_region
        _
      $region44: #{contextnet_block_forward.7} parent=39 // pred_fallthru
        _
      // Predicated region
      $region45: #{contextnet_block_forward.7} parent=39 // pred_check
        %p612 = pneg %p188
      $region46: #{contextnet_block_forward.7} parent=39 // pred_check_branch
        %614 = sbr.rel (%p612) target = $region48
      $region47: #{contextnet_block_forward.7} parent=39 // pred_region
        _
      $region48: #{contextnet_block_forward.7} parent=39 // pred_fallthru
        _
    $region40: #{contextnet_block_forward.7} parent=5 // pred_fallthru
      _
    %p615 = scmp.le.s32.totalorder 2, %s13
    // Predicated region
    $region49: #{contextnet_block_forward.7} parent=5 // pred_check
      %p616 = pneg %p615
    $region50: #{contextnet_block_forward.7} parent=5 // pred_check_branch
      %618 = sbr.rel (%p616) target = $region52
    $region51: #{contextnet_block_forward.7} parent=5 // pred_region
      %s619 = ssub.s32 %s13, 2
      // Predicated region
      $region53: #{contextnet_block_forward.7} parent=51 // pred_check
        %p620 = pneg %p166
      $region54: #{contextnet_block_forward.7} parent=51 // pred_check_branch
        %622 = sbr.rel (%p620) target = $region56
      $region55: #{contextnet_block_forward.7} parent=51 // pred_region
        %p623 = scmp.lt.s32.totalorder %s24, 1
        %s624 = scalar_select %p623, %s24, 1
        %p625 = scmp.lt.s32.totalorder %s25, 1
        %s626 = scalar_select %p625, %s25, 1
        %s627 = smul.addr %s624, 2
        %s628 = sadd.s32 %s626, %s627
        %s629 = smul.addr %s628, 8
        %s630 = scalar_lea.vmem %s5, %s629
      $region56: #{contextnet_block_forward.7} parent=51 // pred_fallthru
        _
      // Predicated region
      $region57: #{contextnet_block_forward.7} parent=51 // pred_check
        %p631 = pneg %p194
      $region58: #{contextnet_block_forward.7} parent=51 // pred_check_branch
        %633 = sbr.rel (%p631) target = $region60
      $region59: #{contextnet_block_forward.7} parent=51 // pred_region
        %p634 = scmp.lt.s32.totalorder %s24, 1
        %s635 = scalar_select %p634, %s24, 1
        %p636 = scmp.lt.s32.totalorder %s25, 1
        %s637 = scalar_select %p636, %s25, 1
        %s638 = smul.addr %s635, 2
        %s639 = sadd.s32 %s637, %s638
        %s640 = smul.addr %s639, 2
        %s641 = scalar_lea.vmem %s6, %s640
      $region60: #{contextnet_block_forward.7} parent=51 // pred_fallthru
        _
    $region52: #{contextnet_block_forward.7} parent=5 // pred_fallthru
      _
  $region6: #{contextnet_block_forward.7} parent=0 // loop_footer
    %s17 = sadd.s32 1, %s13
  $region7: #{contextnet_block_forward.7} parent=0 // loop_footer_branch
    %12 = sbr.rel target = $region3
  $region8: #{contextnet_block_forward.7} parent=0 // loop_exit
    _

</llo_original>
